<compile_context>
chip_gen: v7x
topology: tpu7x:2x2x1
jax: 0.10.0
libtpu: 0.0.40
codegen_flags: <defaults>
</compile_context>

<pallas_src>
import math

import jax
import jax.numpy as jnp
from jax import lax
from jax.experimental import pallas as pl
from jax.experimental.pallas import tpu as pltpu


# ---------------------------------------------------------------------------
# Fused kernel: LSTM recurrence (PyTorch gate order i, f, g, o) + softmax head.
# ---------------------------------------------------------------------------
def gaussian_rnn_kernel(x_ref, wih_t_ref, whh_t_ref, b_ref,
                        wsm_t_ref, bsm_ref, mean_t_ref,
                        mu_ref, hs_ref):
    B, T, K = hs_ref.shape

    # Input projection for every (b, t) at once (hoisted out of the recurrence).
    # x_ref is (B*T, L) with row index = b*T + t.
    gates_x = (
        jnp.dot(x_ref[...], wih_t_ref[...], preferred_element_type=jnp.float32)
        + b_ref[...]
    )                                               # (B*T, 4K)
    gates_x = gates_x.reshape(B, T, 4 * K)          # sublane-group split: free

    whh_t = whh_t_ref[...]                          # load recurrent weights once

    h = jnp.zeros((B, K), jnp.float32)
    c = jnp.zeros((B, K), jnp.float32)

    # Time recurrence, fully unrolled at trace time (T is static and small).
    for t in range(T):
        g = gates_x[:, t, :] + jnp.dot(h, whh_t,
                                       preferred_element_type=jnp.float32)
        i_g = jax.nn.sigmoid(g[:, 0 * K:1 * K])
        f_g = jax.nn.sigmoid(g[:, 1 * K:2 * K])
        g_g = jnp.tanh(g[:, 2 * K:3 * K])
        o_g = jax.nn.sigmoid(g[:, 3 * K:4 * K])
        c = f_g * c + i_g * g_g
        h = o_g * jnp.tanh(c)
        hs_ref[:, pl.ds(t, 1), :] = h.reshape(B, 1, K)

    # Fused softmax head on VMEM-resident h (1/lam pre-folded into wsm_t/bsm).
    h_flat = hs_ref[...].reshape(B * T, K)
    z = (
        jnp.dot(h_flat, wsm_t_ref[...], preferred_element_type=jnp.float32)
        + bsm_ref[...]
    )
    z = z - jnp.max(z, axis=1, keepdims=True)
    e = jnp.exp(z)
    sms = e / jnp.sum(e, axis=1, keepdims=True)
    mu = jnp.dot(sms, mean_t_ref[...], preferred_element_type=jnp.float32)
    mu_ref[...] = mu.reshape(mu_ref.shape)


# ---------------------------------------------------------------------------
# Wrapper: GaussianRNN.forward (usevar=False)
# ---------------------------------------------------------------------------
def gaussian_rnn_forward(inp, params, lam):
    """inp: (B, T, L) float32 (PyTorch batch_first). Returns (mu, None)."""
    W_ih, W_hh = params["W_ih"], params["W_hh"]          # (4K, L), (4K, K)
    b_ih, b_hh = params["b_ih"], params["b_hh"]          # (4K,), (4K,)
    W_sm, b_sm = params["W_sm"], params["b_sm"]          # (K, K), (K,)
    out_mean = params["out_mean"]                        # (L, K)

    B, T, L = inp.shape
    K = W_hh.shape[1]

    # Glue (all cheap / layout-only):
    x2d = inp.reshape(B * T, L).astype(jnp.float32)      # row = b*T + t (free)
    wih_t = W_ih.T                                       # (L, 4K)
    whh_t = W_hh.T                                       # (K, 4K)
    b_all = (b_ih + b_hh).reshape(1, 4 * K).astype(jnp.float32)
    inv_lam = jnp.float32(1.0) / jnp.float32(lam)        # fold 1/lam into head
    wsm_t = (W_sm.T * inv_lam).astype(jnp.float32)       # (K, K)
    bsm = (b_sm * inv_lam).reshape(1, K).astype(jnp.float32)
    mean_t = out_mean.T.astype(jnp.float32)              # (K, L)

    vmem = pltpu.MemorySpace.VMEM
    mu_btl = pl.pallas_call(
        gaussian_rnn_kernel,
        out_shape=jax.ShapeDtypeStruct((B, T, L), jnp.float32),
        in_specs=[pl.BlockSpec(memory_space=vmem)] * 7,
        out_specs=pl.BlockSpec(memory_space=vmem),
        scratch_shapes=[pltpu.VMEM((B, T, K), jnp.float32)],   # h history
    )(x2d, wih_t, whh_t, b_all, wsm_t, bsm, mean_t)

    # PyTorch flattening order: (B, T, L) -> (B*T, L) is a contiguous reshape.
    mu = mu_btl.reshape(B * T, L)
    return mu, None   # usevar=False -> logsig is None


# ---------------------------------------------------------------------------
# Pure-JAX reference (for correctness check only)
# ---------------------------------------------------------------------------
def reference_forward(inp, params, lam):
    W_ih, W_hh = params["W_ih"], params["W_hh"]
    b_ih, b_hh = params["b_ih"], params["b_hh"]
    W_sm, b_sm = params["W_sm"], params["b_sm"]
    out_mean = params["out_mean"]
    B, T, L = inp.shape
    K = W_hh.shape[1]

    def step(carry, x_t):
        h, c = carry
        gates = x_t @ W_ih.T + b_ih + h @ W_hh.T + b_hh
        i, f, g, o = jnp.split(gates, 4, axis=-1)
        c = jax.nn.sigmoid(f) * c + jax.nn.sigmoid(i) * jnp.tanh(g)
        h = jax.nn.sigmoid(o) * jnp.tanh(c)
        return (h, c), h

    h0 = jnp.zeros((B, K), jnp.float32)
    _, hs = lax.scan(step, (h0, h0), jnp.transpose(inp, (1, 0, 2)))
    h_flat = jnp.transpose(hs, (1, 0, 2)).reshape(B * T, K)
    sms = jax.nn.softmax((h_flat @ W_sm.T + b_sm) / lam, axis=1)
    return sms @ out_mean.T


if __name__ == "__main__":
    # Small shapes consistent with GaussianRNN(L, K): batch=2, seq=8, L=8, K=32
    B, T, L, K = 2, 8, 8, 32

    key = jax.random.PRNGKey(0)
    keys = jax.random.split(key, 8)
    s = 1.0 / math.sqrt(K)
    c = 0.1
    params = dict(
        W_ih=jax.random.uniform(keys[0], (4 * K, L), jnp.float32, -s, s),
        W_hh=jax.random.uniform(keys[1], (4 * K, K), jnp.float32, -s, s),
        b_ih=jax.random.uniform(keys[2], (4 * K,), jnp.float32, -s, s),
        b_hh=jax.random.uniform(keys[3], (4 * K,), jnp.float32, -s, s),
        W_sm=jax.random.uniform(keys[4], (K, K), jnp.float32, -s, s),
        b_sm=jax.random.uniform(keys[5], (K,), jnp.float32, -s, s),
        out_mean=c * jax.random.normal(keys[6], (L, K), jnp.float32),
    )
    inp = jax.random.normal(keys[7], (B, T, L), jnp.float32)
    lam = 0.7

    fwd = jax.jit(gaussian_rnn_forward)
    mu, logsig = fwd(inp, params, lam)
    mu = jax.block_until_ready(mu)

    assert mu.shape == (B * T, L), mu.shape
    assert mu.dtype == jnp.float32
    assert logsig is None

    mu_ref = reference_forward(inp, params, lam)
    assert jnp.allclose(mu, mu_ref, rtol=1e-4, atol=1e-4), (
        float(jnp.max(jnp.abs(mu - mu_ref)))
    )

    print("KERNEL_OK")
</pallas_src>

<mosaic_0001>
module attributes {stable_mosaic.version = 11 : i64} {
  func.func @gaussian_rnn_kernel(%arg0: memref<16x8xf32, #tpu.memory_space<vmem>>, %arg1: memref<8x128xf32, #tpu.memory_space<vmem>>, %arg2: memref<32x128xf32, #tpu.memory_space<vmem>>, %arg3: memref<1x128xf32, #tpu.memory_space<vmem>>, %arg4: memref<32x32xf32, #tpu.memory_space<vmem>>, %arg5: memref<1x32xf32, #tpu.memory_space<vmem>>, %arg6: memref<32x8xf32, #tpu.memory_space<vmem>>, %arg7: memref<2x8x8xf32, #tpu.memory_space<vmem>>, %arg8: memref<2x8x32xf32, #tpu.memory_space<vmem>>) attributes {dimension_semantics = [], scalar_prefetch = 0 : i64, scratch_operands = 1 : i64, tpu.core_type = #tpu.core_type<tc>} {
    %c0 = arith.constant 0 : index
    %c0_0 = arith.constant 0 : index
    %0 = vector.load %arg0[%c0, %c0_0] : memref<16x8xf32, #tpu.memory_space<vmem>>, vector<16x8xf32>
    %c0_1 = arith.constant 0 : index
    %c0_2 = arith.constant 0 : index
    %1 = vector.load %arg1[%c0_1, %c0_2] : memref<8x128xf32, #tpu.memory_space<vmem>>, vector<8x128xf32>
    %cst = arith.constant dense<0.000000e+00> : vector<16x128xf32>
    %2 = tpu.matmul %0, %1, %cst {dimension_numbers = #tpu.dot_dimension_numbers<[1], [0], [0], [1], [0, 0, 1, 1], [], []>} : vector<16x8xf32>, vector<8x128xf32>, vector<16x128xf32> -> vector<16x128xf32>
    %c0_3 = arith.constant 0 : index
    %c0_4 = arith.constant 0 : index
    %3 = vector.load %arg3[%c0_3, %c0_4] : memref<1x128xf32, #tpu.memory_space<vmem>>, vector<1x128xf32>
    %4 = vector.broadcast %3 : vector<1x128xf32> to vector<16x128xf32>
    %5 = arith.addf %2, %4 : vector<16x128xf32>
    %6 = vector.shape_cast %5 : vector<16x128xf32> to vector<2x8x128xf32>
    %c0_5 = arith.constant 0 : index
    %c0_6 = arith.constant 0 : index
    %7 = vector.load %arg2[%c0_5, %c0_6] : memref<32x128xf32, #tpu.memory_space<vmem>>, vector<32x128xf32>
    %cst_7 = arith.constant 0.000000e+00 : f32
    %8 = vector.broadcast %cst_7 : f32 to vector<2x32xf32>
    %cst_8 = arith.constant 0.000000e+00 : f32
    %9 = vector.broadcast %cst_8 : f32 to vector<2x32xf32>
    %10 = vector.extract_strided_slice %6 {offsets = [0, 0, 0], sizes = [2, 1, 128], strides = [1, 1, 1]} : vector<2x8x128xf32> to vector<2x1x128xf32>
    %11 = vector.shape_cast %10 : vector<2x1x128xf32> to vector<2x128xf32>
    %cst_9 = arith.constant dense<0.000000e+00> : vector<2x128xf32>
    %12 = tpu.matmul %8, %7, %cst_9 {dimension_numbers = #tpu.dot_dimension_numbers<[1], [0], [0], [1], [0, 0, 1, 1], [], []>} : vector<2x32xf32>, vector<32x128xf32>, vector<2x128xf32> -> vector<2x128xf32>
    %13 = arith.addf %11, %12 : vector<2x128xf32>
    %14 = vector.extract_strided_slice %13 {offsets = [0, 0], sizes = [2, 32], strides = [1, 1]} : vector<2x128xf32> to vector<2x32xf32>
    %15 = arith.negf %14 : vector<2x32xf32>
    %16 = math.exp %15 : vector<2x32xf32>
    %cst_10 = arith.constant 1.000000e+00 : f32
    %17 = vector.broadcast %cst_10 : f32 to vector<2x32xf32>
    %18 = arith.addf %17, %16 : vector<2x32xf32>
    %19 = arith.divf %17, %18 : vector<2x32xf32>
    %20 = vector.extract_strided_slice %13 {offsets = [0, 32], sizes = [2, 32], strides = [1, 1]} : vector<2x128xf32> to vector<2x32xf32>
    %21 = arith.negf %20 : vector<2x32xf32>
    %22 = math.exp %21 : vector<2x32xf32>
    %cst_11 = arith.constant 1.000000e+00 : f32
    %23 = vector.broadcast %cst_11 : f32 to vector<2x32xf32>
    %24 = arith.addf %23, %22 : vector<2x32xf32>
    %25 = arith.divf %23, %24 : vector<2x32xf32>
    %26 = vector.extract_strided_slice %13 {offsets = [0, 64], sizes = [2, 32], strides = [1, 1]} : vector<2x128xf32> to vector<2x32xf32>
    %27 = math.tanh %26 : vector<2x32xf32>
    %28 = vector.extract_strided_slice %13 {offsets = [0, 96], sizes = [2, 32], strides = [1, 1]} : vector<2x128xf32> to vector<2x32xf32>
    %29 = arith.negf %28 : vector<2x32xf32>
    %30 = math.exp %29 : vector<2x32xf32>
    %cst_12 = arith.constant 1.000000e+00 : f32
    %31 = vector.broadcast %cst_12 : f32 to vector<2x32xf32>
    %32 = arith.addf %31, %30 : vector<2x32xf32>
    %33 = arith.divf %31, %32 : vector<2x32xf32>
    %34 = arith.mulf %25, %9 : vector<2x32xf32>
    %35 = arith.mulf %19, %27 : vector<2x32xf32>
    %36 = arith.addf %34, %35 : vector<2x32xf32>
    %37 = math.tanh %36 : vector<2x32xf32>
    %38 = arith.mulf %33, %37 : vector<2x32xf32>
    %39 = vector.shape_cast %38 : vector<2x32xf32> to vector<2x1x32xf32>
    %c0_13 = arith.constant 0 : index
    %c0_14 = arith.constant 0 : index
    %c0_15 = arith.constant 0 : index
    %40 = vector.load %arg8[%c0_13, %c0_14, %c0_15] : memref<2x8x32xf32, #tpu.memory_space<vmem>>, vector<2x1x32xf32>
    tpu.vector_store %arg8[%c0_13, %c0_14, %c0_15], %39 {strides = array<i32>} : memref<2x8x32xf32, #tpu.memory_space<vmem>>, vector<2x1x32xf32>,
    %41 = vector.extract_strided_slice %6 {offsets = [0, 1, 0], sizes = [2, 1, 128], strides = [1, 1, 1]} : vector<2x8x128xf32> to vector<2x1x128xf32>
    %42 = vector.shape_cast %41 : vector<2x1x128xf32> to vector<2x128xf32>
    %cst_16 = arith.constant dense<0.000000e+00> : vector<2x128xf32>
    %43 = tpu.matmul %38, %7, %cst_16 {dimension_numbers = #tpu.dot_dimension_numbers<[1], [0], [0], [1], [0, 0, 1, 1], [], []>} : vector<2x32xf32>, vector<32x128xf32>, vector<2x128xf32> -> vector<2x128xf32>
    %44 = arith.addf %42, %43 : vector<2x128xf32>
    %45 = vector.extract_strided_slice %44 {offsets = [0, 0], sizes = [2, 32], strides = [1, 1]} : vector<2x128xf32> to vector<2x32xf32>
    %46 = arith.negf %45 : vector<2x32xf32>
    %47 = math.exp %46 : vector<2x32xf32>
    %cst_17 = arith.constant 1.000000e+00 : f32
    %48 = vector.broadcast %cst_17 : f32 to vector<2x32xf32>
    %49 = arith.addf %48, %47 : vector<2x32xf32>
    %50 = arith.divf %48, %49 : vector<2x32xf32>
    %51 = vector.extract_strided_slice %44 {offsets = [0, 32], sizes = [2, 32], strides = [1, 1]} : vector<2x128xf32> to vector<2x32xf32>
    %52 = arith.negf %51 : vector<2x32xf32>
    %53 = math.exp %52 : vector<2x32xf32>
    %cst_18 = arith.constant 1.000000e+00 : f32
    %54 = vector.broadcast %cst_18 : f32 to vector<2x32xf32>
    %55 = arith.addf %54, %53 : vector<2x32xf32>
    %56 = arith.divf %54, %55 : vector<2x32xf32>
    %57 = vector.extract_strided_slice %44 {offsets = [0, 64], sizes = [2, 32], strides = [1, 1]} : vector<2x128xf32> to vector<2x32xf32>
    %58 = math.tanh %57 : vector<2x32xf32>
    %59 = vector.extract_strided_slice %44 {offsets = [0, 96], sizes = [2, 32], strides = [1, 1]} : vector<2x128xf32> to vector<2x32xf32>
    %60 = arith.negf %59 : vector<2x32xf32>
    %61 = math.exp %60 : vector<2x32xf32>
    %cst_19 = arith.constant 1.000000e+00 : f32
    %62 = vector.broadcast %cst_19 : f32 to vector<2x32xf32>
    %63 = arith.addf %62, %61 : vector<2x32xf32>
    %64 = arith.divf %62, %63 : vector<2x32xf32>
    %65 = arith.mulf %56, %36 : vector<2x32xf32>
    %66 = arith.mulf %50, %58 : vector<2x32xf32>
    %67 = arith.addf %65, %66 : vector<2x32xf32>
    %68 = math.tanh %67 : vector<2x32xf32>
    %69 = arith.mulf %64, %68 : vector<2x32xf32>
    %70 = vector.shape_cast %69 : vector<2x32xf32> to vector<2x1x32xf32>
    %c0_20 = arith.constant 0 : index
    %c1 = arith.constant 1 : index
    %c0_21 = arith.constant 0 : index
    %71 = vector.load %arg8[%c0_20, %c1, %c0_21] : memref<2x8x32xf32, #tpu.memory_space<vmem>>, vector<2x1x32xf32>
    tpu.vector_store %arg8[%c0_20, %c1, %c0_21], %70 {strides = array<i32>} : memref<2x8x32xf32, #tpu.memory_space<vmem>>, vector<2x1x32xf32>,
    %72 = vector.extract_strided_slice %6 {offsets = [0, 2, 0], sizes = [2, 1, 128], strides = [1, 1, 1]} : vector<2x8x128xf32> to vector<2x1x128xf32>
    %73 = vector.shape_cast %72 : vector<2x1x128xf32> to vector<2x128xf32>
    %cst_22 = arith.constant dense<0.000000e+00> : vector<2x128xf32>
    %74 = tpu.matmul %69, %7, %cst_22 {dimension_numbers = #tpu.dot_dimension_numbers<[1], [0], [0], [1], [0, 0, 1, 1], [], []>} : vector<2x32xf32>, vector<32x128xf32>, vector<2x128xf32> -> vector<2x128xf32>
    %75 = arith.addf %73, %74 : vector<2x128xf32>
    %76 = vector.extract_strided_slice %75 {offsets = [0, 0], sizes = [2, 32], strides = [1, 1]} : vector<2x128xf32> to vector<2x32xf32>
    %77 = arith.negf %76 : vector<2x32xf32>
    %78 = math.exp %77 : vector<2x32xf32>
    %cst_23 = arith.constant 1.000000e+00 : f32
    %79 = vector.broadcast %cst_23 : f32 to vector<2x32xf32>
    %80 = arith.addf %79, %78 : vector<2x32xf32>
    %81 = arith.divf %79, %80 : vector<2x32xf32>
    %82 = vector.extract_strided_slice %75 {offsets = [0, 32], sizes = [2, 32], strides = [1, 1]} : vector<2x128xf32> to vector<2x32xf32>
    %83 = arith.negf %82 : vector<2x32xf32>
    %84 = math.exp %83 : vector<2x32xf32>
    %cst_24 = arith.constant 1.000000e+00 : f32
    %85 = vector.broadcast %cst_24 : f32 to vector<2x32xf32>
    %86 = arith.addf %85, %84 : vector<2x32xf32>
    %87 = arith.divf %85, %86 : vector<2x32xf32>
    %88 = vector.extract_strided_slice %75 {offsets = [0, 64], sizes = [2, 32], strides = [1, 1]} : vector<2x128xf32> to vector<2x32xf32>
    %89 = math.tanh %88 : vector<2x32xf32>
    %90 = vector.extract_strided_slice %75 {offsets = [0, 96], sizes = [2, 32], strides = [1, 1]} : vector<2x128xf32> to vector<2x32xf32>
    %91 = arith.negf %90 : vector<2x32xf32>
    %92 = math.exp %91 : vector<2x32xf32>
    %cst_25 = arith.constant 1.000000e+00 : f32
    %93 = vector.broadcast %cst_25 : f32 to vector<2x32xf32>
    %94 = arith.addf %93, %92 : vector<2x32xf32>
    %95 = arith.divf %93, %94 : vector<2x32xf32>
    %96 = arith.mulf %87, %67 : vector<2x32xf32>
    %97 = arith.mulf %81, %89 : vector<2x32xf32>
    %98 = arith.addf %96, %97 : vector<2x32xf32>
    %99 = math.tanh %98 : vector<2x32xf32>
    %100 = arith.mulf %95, %99 : vector<2x32xf32>
    %101 = vector.shape_cast %100 : vector<2x32xf32> to vector<2x1x32xf32>
    %c0_26 = arith.constant 0 : index
    %c2 = arith.constant 2 : index
    %c0_27 = arith.constant 0 : index
    %102 = vector.load %arg8[%c0_26, %c2, %c0_27] : memref<2x8x32xf32, #tpu.memory_space<vmem>>, vector<2x1x32xf32>
    tpu.vector_store %arg8[%c0_26, %c2, %c0_27], %101 {strides = array<i32>} : memref<2x8x32xf32, #tpu.memory_space<vmem>>, vector<2x1x32xf32>,
    %103 = vector.extract_strided_slice %6 {offsets = [0, 3, 0], sizes = [2, 1, 128], strides = [1, 1, 1]} : vector<2x8x128xf32> to vector<2x1x128xf32>
    %104 = vector.shape_cast %103 : vector<2x1x128xf32> to vector<2x128xf32>
    %cst_28 = arith.constant dense<0.000000e+00> : vector<2x128xf32>
    %105 = tpu.matmul %100, %7, %cst_28 {dimension_numbers = #tpu.dot_dimension_numbers<[1], [0], [0], [1], [0, 0, 1, 1], [], []>} : vector<2x32xf32>, vector<32x128xf32>, vector<2x128xf32> -> vector<2x128xf32>
    %106 = arith.addf %104, %105 : vector<2x128xf32>
    %107 = vector.extract_strided_slice %106 {offsets = [0, 0], sizes = [2, 32], strides = [1, 1]} : vector<2x128xf32> to vector<2x32xf32>
    %108 = arith.negf %107 : vector<2x32xf32>
    %109 = math.exp %108 : vector<2x32xf32>
    %cst_29 = arith.constant 1.000000e+00 : f32
    %110 = vector.broadcast %cst_29 : f32 to vector<2x32xf32>
    %111 = arith.addf %110, %109 : vector<2x32xf32>
    %112 = arith.divf %110, %111 : vector<2x32xf32>
    %113 = vector.extract_strided_slice %106 {offsets = [0, 32], sizes = [2, 32], strides = [1, 1]} : vector<2x128xf32> to vector<2x32xf32>
    %114 = arith.negf %113 : vector<2x32xf32>
    %115 = math.exp %114 : vector<2x32xf32>
    %cst_30 = arith.constant 1.000000e+00 : f32
    %116 = vector.broadcast %cst_30 : f32 to vector<2x32xf32>
    %117 = arith.addf %116, %115 : vector<2x32xf32>
    %118 = arith.divf %116, %117 : vector<2x32xf32>
    %119 = vector.extract_strided_slice %106 {offsets = [0, 64], sizes = [2, 32], strides = [1, 1]} : vector<2x128xf32> to vector<2x32xf32>
    %120 = math.tanh %119 : vector<2x32xf32>
    %121 = vector.extract_strided_slice %106 {offsets = [0, 96], sizes = [2, 32], strides = [1, 1]} : vector<2x128xf32> to vector<2x32xf32>
    %122 = arith.negf %121 : vector<2x32xf32>
    %123 = math.exp %122 : vector<2x32xf32>
    %cst_31 = arith.constant 1.000000e+00 : f32
    %124 = vector.broadcast %cst_31 : f32 to vector<2x32xf32>
    %125 = arith.addf %124, %123 : vector<2x32xf32>
    %126 = arith.divf %124, %125 : vector<2x32xf32>
    %127 = arith.mulf %118, %98 : vector<2x32xf32>
    %128 = arith.mulf %112, %120 : vector<2x32xf32>
    %129 = arith.addf %127, %128 : vector<2x32xf32>
    %130 = math.tanh %129 : vector<2x32xf32>
    %131 = arith.mulf %126, %130 : vector<2x32xf32>
    %132 = vector.shape_cast %131 : vector<2x32xf32> to vector<2x1x32xf32>
    %c0_32 = arith.constant 0 : index
    %c3 = arith.constant 3 : index
    %c0_33 = arith.constant 0 : index
    %133 = vector.load %arg8[%c0_32, %c3, %c0_33] : memref<2x8x32xf32, #tpu.memory_space<vmem>>, vector<2x1x32xf32>
    tpu.vector_store %arg8[%c0_32, %c3, %c0_33], %132 {strides = array<i32>} : memref<2x8x32xf32, #tpu.memory_space<vmem>>, vector<2x1x32xf32>,
    %134 = vector.extract_strided_slice %6 {offsets = [0, 4, 0], sizes = [2, 1, 128], strides = [1, 1, 1]} : vector<2x8x128xf32> to vector<2x1x128xf32>
    %135 = vector.shape_cast %134 : vector<2x1x128xf32> to vector<2x128xf32>
    %cst_34 = arith.constant dense<0.000000e+00> : vector<2x128xf32>
    %136 = tpu.matmul %131, %7, %cst_34 {dimension_numbers = #tpu.dot_dimension_numbers<[1], [0], [0], [1], [0, 0, 1, 1], [], []>} : vector<2x32xf32>, vector<32x128xf32>, vector<2x128xf32> -> vector<2x128xf32>
    %137 = arith.addf %135, %136 : vector<2x128xf32>
    %138 = vector.extract_strided_slice %137 {offsets = [0, 0], sizes = [2, 32], strides = [1, 1]} : vector<2x128xf32> to vector<2x32xf32>
    %139 = arith.negf %138 : vector<2x32xf32>
    %140 = math.exp %139 : vector<2x32xf32>
    %cst_35 = arith.constant 1.000000e+00 : f32
    %141 = vector.broadcast %cst_35 : f32 to vector<2x32xf32>
    %142 = arith.addf %141, %140 : vector<2x32xf32>
    %143 = arith.divf %141, %142 : vector<2x32xf32>
    %144 = vector.extract_strided_slice %137 {offsets = [0, 32], sizes = [2, 32], strides = [1, 1]} : vector<2x128xf32> to vector<2x32xf32>
    %145 = arith.negf %144 : vector<2x32xf32>
    %146 = math.exp %145 : vector<2x32xf32>
    %cst_36 = arith.constant 1.000000e+00 : f32
    %147 = vector.broadcast %cst_36 : f32 to vector<2x32xf32>
    %148 = arith.addf %147, %146 : vector<2x32xf32>
    %149 = arith.divf %147, %148 : vector<2x32xf32>
    %150 = vector.extract_strided_slice %137 {offsets = [0, 64], sizes = [2, 32], strides = [1, 1]} : vector<2x128xf32> to vector<2x32xf32>
    %151 = math.tanh %150 : vector<2x32xf32>
    %152 = vector.extract_strided_slice %137 {offsets = [0, 96], sizes = [2, 32], strides = [1, 1]} : vector<2x128xf32> to vector<2x32xf32>
    %153 = arith.negf %152 : vector<2x32xf32>
    %154 = math.exp %153 : vector<2x32xf32>
    %cst_37 = arith.constant 1.000000e+00 : f32
    %155 = vector.broadcast %cst_37 : f32 to vector<2x32xf32>
    %156 = arith.addf %155, %154 : vector<2x32xf32>
    %157 = arith.divf %155, %156 : vector<2x32xf32>
    %158 = arith.mulf %149, %129 : vector<2x32xf32>
    %159 = arith.mulf %143, %151 : vector<2x32xf32>
    %160 = arith.addf %158, %159 : vector<2x32xf32>
    %161 = math.tanh %160 : vector<2x32xf32>
    %162 = arith.mulf %157, %161 : vector<2x32xf32>
    %163 = vector.shape_cast %162 : vector<2x32xf32> to vector<2x1x32xf32>
    %c0_38 = arith.constant 0 : index
    %c4 = arith.constant 4 : index
    %c0_39 = arith.constant 0 : index
    %164 = vector.load %arg8[%c0_38, %c4, %c0_39] : memref<2x8x32xf32, #tpu.memory_space<vmem>>, vector<2x1x32xf32>
    tpu.vector_store %arg8[%c0_38, %c4, %c0_39], %163 {strides = array<i32>} : memref<2x8x32xf32, #tpu.memory_space<vmem>>, vector<2x1x32xf32>,
    %165 = vector.extract_strided_slice %6 {offsets = [0, 5, 0], sizes = [2, 1, 128], strides = [1, 1, 1]} : vector<2x8x128xf32> to vector<2x1x128xf32>
    %166 = vector.shape_cast %165 : vector<2x1x128xf32> to vector<2x128xf32>
    %cst_40 = arith.constant dense<0.000000e+00> : vector<2x128xf32>
    %167 = tpu.matmul %162, %7, %cst_40 {dimension_numbers = #tpu.dot_dimension_numbers<[1], [0], [0], [1], [0, 0, 1, 1], [], []>} : vector<2x32xf32>, vector<32x128xf32>, vector<2x128xf32> -> vector<2x128xf32>
    %168 = arith.addf %166, %167 : vector<2x128xf32>
    %169 = vector.extract_strided_slice %168 {offsets = [0, 0], sizes = [2, 32], strides = [1, 1]} : vector<2x128xf32> to vector<2x32xf32>
    %170 = arith.negf %169 : vector<2x32xf32>
    %171 = math.exp %170 : vector<2x32xf32>
    %cst_41 = arith.constant 1.000000e+00 : f32
    %172 = vector.broadcast %cst_41 : f32 to vector<2x32xf32>
    %173 = arith.addf %172, %171 : vector<2x32xf32>
    %174 = arith.divf %172, %173 : vector<2x32xf32>
    %175 = vector.extract_strided_slice %168 {offsets = [0, 32], sizes = [2, 32], strides = [1, 1]} : vector<2x128xf32> to vector<2x32xf32>
    %176 = arith.negf %175 : vector<2x32xf32>
    %177 = math.exp %176 : vector<2x32xf32>
    %cst_42 = arith.constant 1.000000e+00 : f32
    %178 = vector.broadcast %cst_42 : f32 to vector<2x32xf32>
    %179 = arith.addf %178, %177 : vector<2x32xf32>
    %180 = arith.divf %178, %179 : vector<2x32xf32>
    %181 = vector.extract_strided_slice %168 {offsets = [0, 64], sizes = [2, 32], strides = [1, 1]} : vector<2x128xf32> to vector<2x32xf32>
    %182 = math.tanh %181 : vector<2x32xf32>
    %183 = vector.extract_strided_slice %168 {offsets = [0, 96], sizes = [2, 32], strides = [1, 1]} : vector<2x128xf32> to vector<2x32xf32>
    %184 = arith.negf %183 : vector<2x32xf32>
    %185 = math.exp %184 : vector<2x32xf32>
    %cst_43 = arith.constant 1.000000e+00 : f32
    %186 = vector.broadcast %cst_43 : f32 to vector<2x32xf32>
    %187 = arith.addf %186, %185 : vector<2x32xf32>
    %188 = arith.divf %186, %187 : vector<2x32xf32>
    %189 = arith.mulf %180, %160 : vector<2x32xf32>
    %190 = arith.mulf %174, %182 : vector<2x32xf32>
    %191 = arith.addf %189, %190 : vector<2x32xf32>
    %192 = math.tanh %191 : vector<2x32xf32>
    %193 = arith.mulf %188, %192 : vector<2x32xf32>
    %194 = vector.shape_cast %193 : vector<2x32xf32> to vector<2x1x32xf32>
    %c0_44 = arith.constant 0 : index
    %c5 = arith.constant 5 : index
    %c0_45 = arith.constant 0 : index
    %195 = vector.load %arg8[%c0_44, %c5, %c0_45] : memref<2x8x32xf32, #tpu.memory_space<vmem>>, vector<2x1x32xf32>
    tpu.vector_store %arg8[%c0_44, %c5, %c0_45], %194 {strides = array<i32>} : memref<2x8x32xf32, #tpu.memory_space<vmem>>, vector<2x1x32xf32>,
    %196 = vector.extract_strided_slice %6 {offsets = [0, 6, 0], sizes = [2, 1, 128], strides = [1, 1, 1]} : vector<2x8x128xf32> to vector<2x1x128xf32>
    %197 = vector.shape_cast %196 : vector<2x1x128xf32> to vector<2x128xf32>
    %cst_46 = arith.constant dense<0.000000e+00> : vector<2x128xf32>
    %198 = tpu.matmul %193, %7, %cst_46 {dimension_numbers = #tpu.dot_dimension_numbers<[1], [0], [0], [1], [0, 0, 1, 1], [], []>} : vector<2x32xf32>, vector<32x128xf32>, vector<2x128xf32> -> vector<2x128xf32>
    %199 = arith.addf %197, %198 : vector<2x128xf32>
    %200 = vector.extract_strided_slice %199 {offsets = [0, 0], sizes = [2, 32], strides = [1, 1]} : vector<2x128xf32> to vector<2x32xf32>
    %201 = arith.negf %200 : vector<2x32xf32>
    %202 = math.exp %201 : vector<2x32xf32>
    %cst_47 = arith.constant 1.000000e+00 : f32
    %203 = vector.broadcast %cst_47 : f32 to vector<2x32xf32>
    %204 = arith.addf %203, %202 : vector<2x32xf32>
    %205 = arith.divf %203, %204 : vector<2x32xf32>
    %206 = vector.extract_strided_slice %199 {offsets = [0, 32], sizes = [2, 32], strides = [1, 1]} : vector<2x128xf32> to vector<2x32xf32>
    %207 = arith.negf %206 : vector<2x32xf32>
    %208 = math.exp %207 : vector<2x32xf32>
    %cst_48 = arith.constant 1.000000e+00 : f32
    %209 = vector.broadcast %cst_48 : f32 to vector<2x32xf32>
    %210 = arith.addf %209, %208 : vector<2x32xf32>
    %211 = arith.divf %209, %210 : vector<2x32xf32>
    %212 = vector.extract_strided_slice %199 {offsets = [0, 64], sizes = [2, 32], strides = [1, 1]} : vector<2x128xf32> to vector<2x32xf32>
    %213 = math.tanh %212 : vector<2x32xf32>
    %214 = vector.extract_strided_slice %199 {offsets = [0, 96], sizes = [2, 32], strides = [1, 1]} : vector<2x128xf32> to vector<2x32xf32>
    %215 = arith.negf %214 : vector<2x32xf32>
    %216 = math.exp %215 : vector<2x32xf32>
    %cst_49 = arith.constant 1.000000e+00 : f32
    %217 = vector.broadcast %cst_49 : f32 to vector<2x32xf32>
    %218 = arith.addf %217, %216 : vector<2x32xf32>
    %219 = arith.divf %217, %218 : vector<2x32xf32>
    %220 = arith.mulf %211, %191 : vector<2x32xf32>
    %221 = arith.mulf %205, %213 : vector<2x32xf32>
    %222 = arith.addf %220, %221 : vector<2x32xf32>
    %223 = math.tanh %222 : vector<2x32xf32>
    %224 = arith.mulf %219, %223 : vector<2x32xf32>
    %225 = vector.shape_cast %224 : vector<2x32xf32> to vector<2x1x32xf32>
    %c0_50 = arith.constant 0 : index
    %c6 = arith.constant 6 : index
    %c0_51 = arith.constant 0 : index
    %226 = vector.load %arg8[%c0_50, %c6, %c0_51] : memref<2x8x32xf32, #tpu.memory_space<vmem>>, vector<2x1x32xf32>
    tpu.vector_store %arg8[%c0_50, %c6, %c0_51], %225 {strides = array<i32>} : memref<2x8x32xf32, #tpu.memory_space<vmem>>, vector<2x1x32xf32>,
    %227 = vector.extract_strided_slice %6 {offsets = [0, 7, 0], sizes = [2, 1, 128], strides = [1, 1, 1]} : vector<2x8x128xf32> to vector<2x1x128xf32>
    %228 = vector.shape_cast %227 : vector<2x1x128xf32> to vector<2x128xf32>
    %cst_52 = arith.constant dense<0.000000e+00> : vector<2x128xf32>
    %229 = tpu.matmul %224, %7, %cst_52 {dimension_numbers = #tpu.dot_dimension_numbers<[1], [0], [0], [1], [0, 0, 1, 1], [], []>} : vector<2x32xf32>, vector<32x128xf32>, vector<2x128xf32> -> vector<2x128xf32>
    %230 = arith.addf %228, %229 : vector<2x128xf32>
    %231 = vector.extract_strided_slice %230 {offsets = [0, 0], sizes = [2, 32], strides = [1, 1]} : vector<2x128xf32> to vector<2x32xf32>
    %232 = arith.negf %231 : vector<2x32xf32>
    %233 = math.exp %232 : vector<2x32xf32>
    %cst_53 = arith.constant 1.000000e+00 : f32
    %234 = vector.broadcast %cst_53 : f32 to vector<2x32xf32>
    %235 = arith.addf %234, %233 : vector<2x32xf32>
    %236 = arith.divf %234, %235 : vector<2x32xf32>
    %237 = vector.extract_strided_slice %230 {offsets = [0, 32], sizes = [2, 32], strides = [1, 1]} : vector<2x128xf32> to vector<2x32xf32>
    %238 = arith.negf %237 : vector<2x32xf32>
    %239 = math.exp %238 : vector<2x32xf32>
    %cst_54 = arith.constant 1.000000e+00 : f32
    %240 = vector.broadcast %cst_54 : f32 to vector<2x32xf32>
    %241 = arith.addf %240, %239 : vector<2x32xf32>
    %242 = arith.divf %240, %241 : vector<2x32xf32>
    %243 = vector.extract_strided_slice %230 {offsets = [0, 64], sizes = [2, 32], strides = [1, 1]} : vector<2x128xf32> to vector<2x32xf32>
    %244 = math.tanh %243 : vector<2x32xf32>
    %245 = vector.extract_strided_slice %230 {offsets = [0, 96], sizes = [2, 32], strides = [1, 1]} : vector<2x128xf32> to vector<2x32xf32>
    %246 = arith.negf %245 : vector<2x32xf32>
    %247 = math.exp %246 : vector<2x32xf32>
    %cst_55 = arith.constant 1.000000e+00 : f32
    %248 = vector.broadcast %cst_55 : f32 to vector<2x32xf32>
    %249 = arith.addf %248, %247 : vector<2x32xf32>
    %250 = arith.divf %248, %249 : vector<2x32xf32>
    %251 = arith.mulf %242, %222 : vector<2x32xf32>
    %252 = arith.mulf %236, %244 : vector<2x32xf32>
    %253 = arith.addf %251, %252 : vector<2x32xf32>
    %254 = math.tanh %253 : vector<2x32xf32>
    %255 = arith.mulf %250, %254 : vector<2x32xf32>
    %256 = vector.shape_cast %255 : vector<2x32xf32> to vector<2x1x32xf32>
    %c0_56 = arith.constant 0 : index
    %c7 = arith.constant 7 : index
    %c0_57 = arith.constant 0 : index
    %257 = vector.load %arg8[%c0_56, %c7, %c0_57] : memref<2x8x32xf32, #tpu.memory_space<vmem>>, vector<2x1x32xf32>
    tpu.vector_store %arg8[%c0_56, %c7, %c0_57], %256 {strides = array<i32>} : memref<2x8x32xf32, #tpu.memory_space<vmem>>, vector<2x1x32xf32>,
    %c0_58 = arith.constant 0 : index
    %c0_59 = arith.constant 0 : index
    %c0_60 = arith.constant 0 : index
    %258 = vector.load %arg8[%c0_58, %c0_59, %c0_60] : memref<2x8x32xf32, #tpu.memory_space<vmem>>, vector<2x8x32xf32>
    %259 = vector.shape_cast %258 : vector<2x8x32xf32> to vector<16x32xf32>
    %c0_61 = arith.constant 0 : index
    %c0_62 = arith.constant 0 : index
    %260 = vector.load %arg4[%c0_61, %c0_62] : memref<32x32xf32, #tpu.memory_space<vmem>>, vector<32x32xf32>
    %cst_63 = arith.constant dense<0.000000e+00> : vector<16x32xf32>
    %261 = tpu.matmul %259, %260, %cst_63 {dimension_numbers = #tpu.dot_dimension_numbers<[1], [0], [0], [1], [0, 0, 1, 1], [], []>} : vector<16x32xf32>, vector<32x32xf32>, vector<16x32xf32> -> vector<16x32xf32>
    %c0_64 = arith.constant 0 : index
    %c0_65 = arith.constant 0 : index
    %262 = vector.load %arg5[%c0_64, %c0_65] : memref<1x32xf32, #tpu.memory_space<vmem>>, vector<1x32xf32>
    %263 = vector.broadcast %262 : vector<1x32xf32> to vector<16x32xf32>
    %264 = arith.addf %261, %263 : vector<16x32xf32>
    %cst_66 = arith.constant dense<0xFF800000> : vector<16xf32>
    %265 = vector.multi_reduction <maximumf>, %264, %cst_66 [1] : vector<16x32xf32> to vector<16xf32>
    %266 = vector.shape_cast %265 : vector<16xf32> to vector<16x1xf32>
    %267 = vector.broadcast %266 : vector<16x1xf32> to vector<16x32xf32>
    %268 = arith.subf %264, %267 : vector<16x32xf32>
    %269 = math.exp %268 : vector<16x32xf32>
    %cst_67 = arith.constant dense<0.000000e+00> : vector<16xf32>
    %270 = vector.multi_reduction <add>, %269, %cst_67 [1] : vector<16x32xf32> to vector<16xf32>
    %271 = vector.shape_cast %270 : vector<16xf32> to vector<16x1xf32>
    %272 = vector.broadcast %271 : vector<16x1xf32> to vector<16x32xf32>
    %273 = arith.divf %269, %272 : vector<16x32xf32>
    %c0_68 = arith.constant 0 : index
    %c0_69 = arith.constant 0 : index
    %274 = vector.load %arg6[%c0_68, %c0_69] : memref<32x8xf32, #tpu.memory_space<vmem>>, vector<32x8xf32>
    %cst_70 = arith.constant dense<0.000000e+00> : vector<16x8xf32>
    %275 = tpu.matmul %273, %274, %cst_70 {dimension_numbers = #tpu.dot_dimension_numbers<[1], [0], [0], [1], [0, 0, 1, 1], [], []>} : vector<16x32xf32>, vector<32x8xf32>, vector<16x8xf32> -> vector<16x8xf32>
    %276 = vector.shape_cast %275 : vector<16x8xf32> to vector<2x8x8xf32>
    %c0_71 = arith.constant 0 : index
    %c0_72 = arith.constant 0 : index
    %c0_73 = arith.constant 0 : index
    %277 = vector.load %arg7[%c0_71, %c0_72, %c0_73] : memref<2x8x8xf32, #tpu.memory_space<vmem>>, vector<2x8x8xf32>
    tpu.vector_store %arg7[%c0_71, %c0_72, %c0_73], %276 {strides = array<i32>} : memref<2x8x8xf32, #tpu.memory_space<vmem>>, vector<2x8x8xf32>,
    return
  }
}

</mosaic_0001>

<llo_original>
// kernel: gaussian_rnn_forward.1
$region0: #{gaussian_rnn_forward.1}
  #allocation0 [shape = 'u32[]', space=smem, size = 0x4, offset = 0x4, fixed_abs, tag = 'smem constant byte address 0x4 - core index']
  #allocation1 [shape = 'u32[144,128]{1,0:T(1,128)}', space=vmem, size = 0x12000, scoped, tag = 'internal scratch']
  #allocation2 [shape = 'f32[2,8,32]{2,1,0:T(8,128)}', space=vmem, size = 0x2000, scoped, tag = 'scratch operand']
  %s0 = inlined_call_operand.vmem [shape: f32[16,8], index: 0, kind: input, shape index: {}]
  %s1 = inlined_call_operand.vmem [shape: f32[8,128], index: 1, kind: input, shape index: {}]
  %s2 = inlined_call_operand.vmem [shape: f32[32,128], index: 2, kind: input, shape index: {}]
  %s3 = inlined_call_operand.vmem [shape: f32[1,128], index: 3, kind: input, shape index: {}]
  %s4 = inlined_call_operand.vmem [shape: f32[32,32], index: 4, kind: input, shape index: {}]
  %s5 = inlined_call_operand.vmem [shape: f32[1,32], index: 5, kind: input, shape index: {}]
  %s6 = inlined_call_operand.vmem [shape: f32[32,8], index: 6, kind: input, shape index: {}]
  %s7 = inlined_call_operand.vmem [shape: f32[2,8,8], index: 7, kind: output, shape index: {}]
  %s8 = sld [smem:[#allocation0]]
  $region38: #{gaussian_rnn_forward.1} parent=0
    _
  %s10 = ssub.s32 1, %s8
  %s11 = scalar_select 0, %s10, %s8
  // Predicated region
  $region2: #{gaussian_rnn_forward.1} parent=0 // pred_check
    _
  $region3: #{gaussian_rnn_forward.1} parent=0 // pred_check_branch
    %13 = sbr.rel (0) target = $region5
  $region4: #{gaussian_rnn_forward.1} parent=0 // pred_region
    _
  $region5: #{gaussian_rnn_forward.1} parent=0 // pred_fallthru
    _
  // Predicated region
  $region6: #{gaussian_rnn_forward.1} parent=0 // pred_check
    _
  $region7: #{gaussian_rnn_forward.1} parent=0 // pred_check_branch
    %15 = sbr.rel (0) target = $region9
  $region8: #{gaussian_rnn_forward.1} parent=0 // pred_region
    _
  $region9: #{gaussian_rnn_forward.1} parent=0 // pred_fallthru
    _
  // Predicated region
  $region10: #{gaussian_rnn_forward.1} parent=0 // pred_check
    _
  $region11: #{gaussian_rnn_forward.1} parent=0 // pred_check_branch
    %17 = sbr.rel (0) target = $region13
  $region12: #{gaussian_rnn_forward.1} parent=0 // pred_region
    _
  $region13: #{gaussian_rnn_forward.1} parent=0 // pred_fallthru
    _
  // Predicated region
  $region14: #{gaussian_rnn_forward.1} parent=0 // pred_check
    _
  $region15: #{gaussian_rnn_forward.1} parent=0 // pred_check_branch
    %19 = sbr.rel (0) target = $region17
  $region16: #{gaussian_rnn_forward.1} parent=0 // pred_region
    _
  $region17: #{gaussian_rnn_forward.1} parent=0 // pred_fallthru
    _
  // Predicated region
  $region18: #{gaussian_rnn_forward.1} parent=0 // pred_check
    _
  $region19: #{gaussian_rnn_forward.1} parent=0 // pred_check_branch
    %21 = sbr.rel (0) target = $region21
  $region20: #{gaussian_rnn_forward.1} parent=0 // pred_region
    _
  $region21: #{gaussian_rnn_forward.1} parent=0 // pred_fallthru
    _
  // Predicated region
  $region22: #{gaussian_rnn_forward.1} parent=0 // pred_check
    _
  $region23: #{gaussian_rnn_forward.1} parent=0 // pred_check_branch
    %23 = sbr.rel (0) target = $region25
  $region24: #{gaussian_rnn_forward.1} parent=0 // pred_region
    _
  $region25: #{gaussian_rnn_forward.1} parent=0 // pred_fallthru
    _
  // Predicated region
  $region26: #{gaussian_rnn_forward.1} parent=0 // pred_check
    _
  $region27: #{gaussian_rnn_forward.1} parent=0 // pred_check_branch
    %25 = sbr.rel (0) target = $region29
  $region28: #{gaussian_rnn_forward.1} parent=0 // pred_region
    _
  $region29: #{gaussian_rnn_forward.1} parent=0 // pred_fallthru
    _
  %v26 = vld [vmem:[%s0] sm:$0xff]
  %v27 = vld [vmem:[%s0 + $0x8] sm:$0xff]
  %v28 = vld [vmem:[%s1] sm:$0xff]
  %v29 = vld [vmem:[%s3] sm:$0x1]
  %v31 = vlaneseq
  %v32 = vshrl.u32 %v31, 7
  %v33 = vsub.s32 0, %v32
  %v34 = vrot.slane %v29, %v33
  %vm36 = vcmask 64512
  %v38 = vsel %vm36, %v26, 0
  %v41 = vsel %vm36, %v27, 0
  %43 = vmatprep.subr.mxu0 0.0
  %44 = vmatpush1.msra.mxu0 %v28
  %45 = vmatprep.subr.mxu0 0.0
  %46 = vmatpush1.msra.mxu0 0.0
  %47 = vmatprep.subr.mxu0 0.0
  %48 = vmatpush1.msra.mxu0 0.0
  %49 = vmatprep.subr.mxu0 0.0
  %50 = vmatpush1.msra.mxu0 0.0
  %51 = vmatprep.subr.mxu0 0.0
  %52 = vmatpush1.msra.mxu0 0.0
  %53 = vmatprep.subr.mxu0 0.0
  %54 = vmatpush1.msra.mxu0 0.0
  %55 = vmatprep.subr.mxu0 0.0
  %56 = vmatpush1.msra.mxu0 0.0
  %57 = vmatprep.subr.mxu0 0.0
  %58 = vmatpush1.msra.mxu0 0.0
  %59 = vmatprep.subr.mxu0 0.0
  %60 = vmatpush1.msra.mxu0 0.0
  %61 = vmatprep.subr.mxu0 0.0
  %62 = vmatpush1.msra.mxu0 0.0
  %63 = vmatprep.subr.mxu0 0.0
  %64 = vmatpush1.msra.mxu0 0.0
  %65 = vmatprep.subr.mxu0 0.0
  %66 = vmatpush1.msra.mxu0 0.0
  %67 = vmatprep.subr.mxu0 0.0
  %68 = vmatpush1.msra.mxu0 0.0
  %69 = vmatprep.subr.mxu0 0.0
  %70 = vmatpush1.msra.mxu0 0.0
  %71 = vmatprep.subr.mxu0 0.0
  %72 = vmatpush1.msra.mxu0 0.0
  %73 = vmatprep.subr.mxu0 0.0
  %74 = vmatpush1.msra.mxu0 0.0
  %75 = vmatprep.subr.mxu0 0.0
  %76 = vmatpush1.msra.mxu0 0.0
  %77 = vmatprep.subr.mxu0 0.0
  %78 = vmatpush1.msra.mxu0 0.0
  %79 = vmatprep.subr.mxu0 0.0
  %80 = vmatpush1.msra.mxu0 0.0
  %81 = vmatprep.subr.mxu0 0.0
  %82 = vmatpush1.msra.mxu0 0.0
  %83 = vmatprep.subr.mxu0 0.0
  %84 = vmatpush1.msra.mxu0 0.0
  %85 = vmatprep.subr.mxu0 0.0
  %86 = vmatpush1.msra.mxu0 0.0
  %87 = vmatprep.subr.mxu0 0.0
  %88 = vmatpush1.msra.mxu0 0.0
  %89 = vmatprep.subr.mxu0 0.0
  %90 = vmatpush1.msra.mxu0 0.0
  %91 = vmatprep.subr.mxu0 0.0
  %92 = vmatpush1.msra.mxu0 0.0
  %93 = vmatprep.subr.mxu0 0.0
  %94 = vmatpush1.msra.mxu0 0.0
  %95 = vmatprep.subr.mxu0 0.0
  %96 = vmatpush1.msra.mxu0 0.0
  %97 = vmatprep.subr.mxu0 0.0
  %98 = vmatpush1.msra.mxu0 0.0
  %99 = vmatprep.subr.mxu0 0.0
  %100 = vmatpush1.msra.mxu0 0.0
  %101 = vmatprep.subr.mxu0 0.0
  %102 = vmatpush1.msra.mxu0 0.0
  %103 = vmatprep.subr.mxu0 0.0
  %104 = vmatpush1.msra.mxu0 0.0
  %105 = vmatprep.subr.mxu0 0.0
  %106 = vmatpush1.msra.mxu0 0.0
  %107 = vmatprep.mubr.f32.mxu0 0.0
  %108 = vmatmul.mubr.f32.gmra.mrb[0].mxu0 %v38
  %v109 = vpop.f32.mrb[0].mxu0
  %v110 = vadd.f32 %v34, %v109
  %v111 = vpop.f32.mrb[0].mxu0
  %112 = vmatprep.mubr.f32.mxu0 0.0
  %113 = vmatmul.mubr.f32.gmra.mrb[0].mxu0 %v41
  %v114 = vpop.f32.mrb[0].mxu0
  %v115 = vadd.f32 %v34, %v114
  %v116 = vpop.f32.mrb[0].mxu0
  %117 = vdwg.mxu0
  %v118 = vld [vmem:[%s2] sm:$0xff]
  %v119 = vld [vmem:[%s2 + $0x8] sm:$0xff]
  %v120 = vld [vmem:[%s2 + $0x10] sm:$0xff]
  %v121 = vld [vmem:[%s2 + $0x18] sm:$0xff]
  %vm122 = vcmask 261120
  %v124 = vsel %vm122, 0.0, 0
  %126 = vmatprep.subr.mxu0 0.0
  %127 = vmatpush1.msra.mxu0 %v118
  %128 = vmatprep.subr.mxu0 0.0
  %129 = vmatpush1.msra.mxu0 %v119
  %130 = vmatprep.subr.mxu0 0.0
  %131 = vmatpush1.msra.mxu0 %v120
  %132 = vmatprep.subr.mxu0 0.0
  %133 = vmatpush1.msra.mxu0 %v121
  %134 = vmatprep.subr.mxu0 0.0
  %135 = vmatpush1.msra.mxu0 0.0
  %136 = vmatprep.subr.mxu0 0.0
  %137 = vmatpush1.msra.mxu0 0.0
  %138 = vmatprep.subr.mxu0 0.0
  %139 = vmatpush1.msra.mxu0 0.0
  %140 = vmatprep.subr.mxu0 0.0
  %141 = vmatpush1.msra.mxu0 0.0
  %142 = vmatprep.subr.mxu0 0.0
  %143 = vmatpush1.msra.mxu0 0.0
  %144 = vmatprep.subr.mxu0 0.0
  %145 = vmatpush1.msra.mxu0 0.0
  %146 = vmatprep.subr.mxu0 0.0
  %147 = vmatpush1.msra.mxu0 0.0
  %148 = vmatprep.subr.mxu0 0.0
  %149 = vmatpush1.msra.mxu0 0.0
  %150 = vmatprep.subr.mxu0 0.0
  %151 = vmatpush1.msra.mxu0 0.0
  %152 = vmatprep.subr.mxu0 0.0
  %153 = vmatpush1.msra.mxu0 0.0
  %154 = vmatprep.subr.mxu0 0.0
  %155 = vmatpush1.msra.mxu0 0.0
  %156 = vmatprep.subr.mxu0 0.0
  %157 = vmatpush1.msra.mxu0 0.0
  %158 = vmatprep.subr.mxu0 0.0
  %159 = vmatpush1.msra.mxu0 0.0
  %160 = vmatprep.subr.mxu0 0.0
  %161 = vmatpush1.msra.mxu0 0.0
  %162 = vmatprep.subr.mxu0 0.0
  %163 = vmatpush1.msra.mxu0 0.0
  %164 = vmatprep.subr.mxu0 0.0
  %165 = vmatpush1.msra.mxu0 0.0
  %166 = vmatprep.subr.mxu0 0.0
  %167 = vmatpush1.msra.mxu0 0.0
  %168 = vmatprep.subr.mxu0 0.0
  %169 = vmatpush1.msra.mxu0 0.0
  %170 = vmatprep.subr.mxu0 0.0
  %171 = vmatpush1.msra.mxu0 0.0
  %172 = vmatprep.subr.mxu0 0.0
  %173 = vmatpush1.msra.mxu0 0.0
  %174 = vmatprep.subr.mxu0 0.0
  %175 = vmatpush1.msra.mxu0 0.0
  %176 = vmatprep.subr.mxu0 0.0
  %177 = vmatpush1.msra.mxu0 0.0
  %178 = vmatprep.subr.mxu0 0.0
  %179 = vmatpush1.msra.mxu0 0.0
  %180 = vmatprep.subr.mxu0 0.0
  %181 = vmatpush1.msra.mxu0 0.0
  %182 = vmatprep.subr.mxu0 0.0
  %183 = vmatpush1.msra.mxu0 0.0
  %184 = vmatprep.subr.mxu0 0.0
  %185 = vmatpush1.msra.mxu0 0.0
  %186 = vmatprep.subr.mxu0 0.0
  %187 = vmatpush1.msra.mxu0 0.0
  %188 = vmatprep.subr.mxu0 0.0
  %189 = vmatpush1.msra.mxu0 0.0
  %190 = vmatprep.mubr.f32.mxu0 0.0
  %191 = vmatmul.mubr.f32.gmra.mrb[0].mxu0 %v124
  %v192 = vpop.f32.mrb[0].mxu0
  %v193 = vadd.f32 0.0, %v192
  %v194 = vpop.f32.mrb[0].mxu0
  %195 = vdwg.mxu0
  %v197 = vrot.slane %v193, 1
  %v200 = vadd.f32 %v110, %v193
  %v201 = vadd.f32 %v115, %v197
  %v202 = vxor.u32 %v200, 2147483648
  %v203 = vxor.u32 %v201, 2147483648
  %v204 = vmul.f32 %v202, 1.442695
  %v205 = vpow.pop %v204
  %v206 = vmul.f32 %v203, 1.442695
  %v207 = vpow.pop %v206
  %v208 = vadd.f32 %v205, 1.0
  %v209 = vadd.f32 %v207, 1.0
  %v210 = vrcp.pop %v208
  %v211 = vmul.f32 1.0, %v210
  %v212 = vrcp.pop %v209
  %v213 = vmul.f32 1.0, %v212
  %v214 = vtanh.pop %v200
  %v215 = vtanh.pop %v201
  %v216 = vmul.f32 %v211, 0.0
  %v217 = vmul.f32 %v213, 0.0
  %220 = vrot.lane.b32.xlu0 %v214, 64
  %v221 = vpop.permute.xlu0 %220
  %222 = vrot.lane.b32.xlu0 %v215, 64
  %v223 = vpop.permute.xlu0 %222
  %v226 = vmul.f32 %v211, %v221
  %v227 = vmul.f32 %v213, %v223
  %230 = vrot.lane.b32.xlu0 %v226, 32
  %v231 = vpop.permute.xlu0 %230
  %232 = vrot.lane.b32.xlu0 %v227, 32
  %v233 = vpop.permute.xlu0 %232
  %v236 = vadd.f32 %v216, %v231
  %v237 = vadd.f32 %v217, %v233
  %v238 = vtanh.pop %v236
  %v239 = vtanh.pop %v237
  %242 = vrot.lane.b32.xlu0 %v238, 64
  %v243 = vpop.permute.xlu0 %242
  %244 = vrot.lane.b32.xlu0 %v239, 64
  %v245 = vpop.permute.xlu0 %244
  %v248 = vmul.f32 %v211, %v243
  %v249 = vmul.f32 %v213, %v245
  %252 = vrot.lane.b32.xlu0 %v248, 32
  %v253 = vpop.permute.xlu0 %252
  %254 = vrot.lane.b32.xlu0 %v249, 32
  %v255 = vpop.permute.xlu0 %254
  %vm258 = vcmask 253952
  %259 = vst.msk [vmem:[#allocation2] sm:$0x1] %vm258, %v253
  %260 = vst.msk [vmem:[#allocation2 + $0x8] sm:$0x1] %vm258, %v255
  %v261 = vrot.slane %v249, 7
  %vm262 = vcmask 1041409
  %v263 = vsel %vm262, %v261, %v248
  %264 = vrot.lane.b32.xlu0 %v263, 32
  %v265 = vpop.permute.xlu0 %264
  %v266 = vsel %vm122, %v265, 0
  %268 = vmatprep.subr.mxu0 0.0
  %269 = vmatpush1.msra.mxu0 %v118
  %270 = vmatprep.subr.mxu0 0.0
  %271 = vmatpush1.msra.mxu0 %v119
  %272 = vmatprep.subr.mxu0 0.0
  %273 = vmatpush1.msra.mxu0 %v120
  %274 = vmatprep.subr.mxu0 0.0
  %275 = vmatpush1.msra.mxu0 %v121
  %276 = vmatprep.subr.mxu0 0.0
  %277 = vmatpush1.msra.mxu0 0.0
  %278 = vmatprep.subr.mxu0 0.0
  %279 = vmatpush1.msra.mxu0 0.0
  %280 = vmatprep.subr.mxu0 0.0
  %281 = vmatpush1.msra.mxu0 0.0
  %282 = vmatprep.subr.mxu0 0.0
  %283 = vmatpush1.msra.mxu0 0.0
  %284 = vmatprep.subr.mxu0 0.0
  %285 = vmatpush1.msra.mxu0 0.0
  %286 = vmatprep.subr.mxu0 0.0
  %287 = vmatpush1.msra.mxu0 0.0
  %288 = vmatprep.subr.mxu0 0.0
  %289 = vmatpush1.msra.mxu0 0.0
  %290 = vmatprep.subr.mxu0 0.0
  %291 = vmatpush1.msra.mxu0 0.0
  %292 = vmatprep.subr.mxu0 0.0
  %293 = vmatpush1.msra.mxu0 0.0
  %294 = vmatprep.subr.mxu0 0.0
  %295 = vmatpush1.msra.mxu0 0.0
  %296 = vmatprep.subr.mxu0 0.0
  %297 = vmatpush1.msra.mxu0 0.0
  %298 = vmatprep.subr.mxu0 0.0
  %299 = vmatpush1.msra.mxu0 0.0
  %300 = vmatprep.subr.mxu0 0.0
  %301 = vmatpush1.msra.mxu0 0.0
  %302 = vmatprep.subr.mxu0 0.0
  %303 = vmatpush1.msra.mxu0 0.0
  %304 = vmatprep.subr.mxu0 0.0
  %305 = vmatpush1.msra.mxu0 0.0
  %306 = vmatprep.subr.mxu0 0.0
  %307 = vmatpush1.msra.mxu0 0.0
  %308 = vmatprep.subr.mxu0 0.0
  %309 = vmatpush1.msra.mxu0 0.0
  %310 = vmatprep.subr.mxu0 0.0
  %311 = vmatpush1.msra.mxu0 0.0
  %312 = vmatprep.subr.mxu0 0.0
  %313 = vmatpush1.msra.mxu0 0.0
  %314 = vmatprep.subr.mxu0 0.0
  %315 = vmatpush1.msra.mxu0 0.0
  %316 = vmatprep.subr.mxu0 0.0
  %317 = vmatpush1.msra.mxu0 0.0
  %318 = vmatprep.subr.mxu0 0.0
  %319 = vmatpush1.msra.mxu0 0.0
  %320 = vmatprep.subr.mxu0 0.0
  %321 = vmatpush1.msra.mxu0 0.0
  %322 = vmatprep.subr.mxu0 0.0
  %323 = vmatpush1.msra.mxu0 0.0
  %324 = vmatprep.subr.mxu0 0.0
  %325 = vmatpush1.msra.mxu0 0.0
  %326 = vmatprep.subr.mxu0 0.0
  %327 = vmatpush1.msra.mxu0 0.0
  %328 = vmatprep.subr.mxu0 0.0
  %329 = vmatpush1.msra.mxu0 0.0
  %330 = vmatprep.subr.mxu0 0.0
  %331 = vmatpush1.msra.mxu0 0.0
  %332 = vmatprep.mubr.f32.mxu0 0.0
  %333 = vmatmul.mubr.f32.gmra.mrb[0].mxu0 %v266
  %v334 = vpop.f32.mrb[0].mxu0
  %v335 = vadd.f32 0.0, %v334
  %v336 = vpop.f32.mrb[0].mxu0
  %337 = vdwg.mxu0
  %v339 = vrot.slane %v335, 7
  %v342 = vadd.f32 %v110, %v339
  %v343 = vadd.f32 %v115, %v335
  %v344 = vxor.u32 %v342, 2147483648
  %v345 = vxor.u32 %v343, 2147483648
  %v346 = vmul.f32 %v344, 1.442695
  %v347 = vpow.pop %v346
  %v348 = vmul.f32 %v345, 1.442695
  %v349 = vpow.pop %v348
  %v350 = vadd.f32 %v347, 1.0
  %v351 = vadd.f32 %v349, 1.0
  %v352 = vrcp.pop %v350
  %v353 = vmul.f32 1.0, %v352
  %v354 = vrcp.pop %v351
  %v355 = vmul.f32 1.0, %v354
  %v356 = vtanh.pop %v342
  %v357 = vtanh.pop %v343
  %v360 = vrot.slane %v236, 7
  %v361 = vrot.slane %v237, 7
  %v364 = vmul.f32 %v353, %v360
  %v365 = vmul.f32 %v355, %v361
  %368 = vrot.lane.b32.xlu0 %v356, 64
  %v369 = vpop.permute.xlu0 %368
  %370 = vrot.lane.b32.xlu0 %v357, 64
  %v371 = vpop.permute.xlu0 %370
  %v374 = vmul.f32 %v353, %v369
  %v375 = vmul.f32 %v355, %v371
  %378 = vrot.lane.b32.xlu0 %v374, 32
  %v379 = vpop.permute.xlu0 %378
  %380 = vrot.lane.b32.xlu0 %v375, 32
  %v381 = vpop.permute.xlu0 %380
  %v384 = vadd.f32 %v364, %v379
  %v385 = vadd.f32 %v365, %v381
  %v386 = vtanh.pop %v384
  %v387 = vtanh.pop %v385
  %390 = vrot.lane.b32.xlu0 %v386, 64
  %v391 = vpop.permute.xlu0 %390
  %392 = vrot.lane.b32.xlu0 %v387, 64
  %v393 = vpop.permute.xlu0 %392
  %v396 = vmul.f32 %v353, %v391
  %v397 = vmul.f32 %v355, %v393
  %400 = vrot.lane.b32.xlu0 %v396, 32
  %v401 = vpop.permute.xlu0 %400
  %402 = vrot.lane.b32.xlu0 %v397, 32
  %v403 = vpop.permute.xlu0 %402
  %vm406 = vcmask 254977
  %407 = vst.msk [vmem:[#allocation2] sm:$0x2] %vm406, %v401
  %408 = vst.msk [vmem:[#allocation2 + $0x8] sm:$0x2] %vm406, %v403
  %v409 = vrot.slane %v396, 1
  %v410 = vsel %vm262, %v397, %v409
  %411 = vrot.lane.b32.xlu0 %v410, 32
  %v412 = vpop.permute.xlu0 %411
  %v413 = vsel %vm122, %v412, 0
  %415 = vmatprep.subr.mxu0 0.0
  %416 = vmatpush1.msra.mxu0 %v118
  %417 = vmatprep.subr.mxu0 0.0
  %418 = vmatpush1.msra.mxu0 %v119
  %419 = vmatprep.subr.mxu0 0.0
  %420 = vmatpush1.msra.mxu0 %v120
  %421 = vmatprep.subr.mxu0 0.0
  %422 = vmatpush1.msra.mxu0 %v121
  %423 = vmatprep.subr.mxu0 0.0
  %424 = vmatpush1.msra.mxu0 0.0
  %425 = vmatprep.subr.mxu0 0.0
  %426 = vmatpush1.msra.mxu0 0.0
  %427 = vmatprep.subr.mxu0 0.0
  %428 = vmatpush1.msra.mxu0 0.0
  %429 = vmatprep.subr.mxu0 0.0
  %430 = vmatpush1.msra.mxu0 0.0
  %431 = vmatprep.subr.mxu0 0.0
  %432 = vmatpush1.msra.mxu0 0.0
  %433 = vmatprep.subr.mxu0 0.0
  %434 = vmatpush1.msra.mxu0 0.0
  %435 = vmatprep.subr.mxu0 0.0
  %436 = vmatpush1.msra.mxu0 0.0
  %437 = vmatprep.subr.mxu0 0.0
  %438 = vmatpush1.msra.mxu0 0.0
  %439 = vmatprep.subr.mxu0 0.0
  %440 = vmatpush1.msra.mxu0 0.0
  %441 = vmatprep.subr.mxu0 0.0
  %442 = vmatpush1.msra.mxu0 0.0
  %443 = vmatprep.subr.mxu0 0.0
  %444 = vmatpush1.msra.mxu0 0.0
  %445 = vmatprep.subr.mxu0 0.0
  %446 = vmatpush1.msra.mxu0 0.0
  %447 = vmatprep.subr.mxu0 0.0
  %448 = vmatpush1.msra.mxu0 0.0
  %449 = vmatprep.subr.mxu0 0.0
  %450 = vmatpush1.msra.mxu0 0.0
  %451 = vmatprep.subr.mxu0 0.0
  %452 = vmatpush1.msra.mxu0 0.0
  %453 = vmatprep.subr.mxu0 0.0
  %454 = vmatpush1.msra.mxu0 0.0
  %455 = vmatprep.subr.mxu0 0.0
  %456 = vmatpush1.msra.mxu0 0.0
  %457 = vmatprep.subr.mxu0 0.0
  %458 = vmatpush1.msra.mxu0 0.0
  %459 = vmatprep.subr.mxu0 0.0
  %460 = vmatpush1.msra.mxu0 0.0
  %461 = vmatprep.subr.mxu0 0.0
  %462 = vmatpush1.msra.mxu0 0.0
  %463 = vmatprep.subr.mxu0 0.0
  %464 = vmatpush1.msra.mxu0 0.0
  %465 = vmatprep.subr.mxu0 0.0
  %466 = vmatpush1.msra.mxu0 0.0
  %467 = vmatprep.subr.mxu0 0.0
  %468 = vmatpush1.msra.mxu0 0.0
  %469 = vmatprep.subr.mxu0 0.0
  %470 = vmatpush1.msra.mxu0 0.0
  %471 = vmatprep.subr.mxu0 0.0
  %472 = vmatpush1.msra.mxu0 0.0
  %473 = vmatprep.subr.mxu0 0.0
  %474 = vmatpush1.msra.mxu0 0.0
  %475 = vmatprep.subr.mxu0 0.0
  %476 = vmatpush1.msra.mxu0 0.0
  %477 = vmatprep.subr.mxu0 0.0
  %478 = vmatpush1.msra.mxu0 0.0
  %479 = vmatprep.mubr.f32.mxu0 0.0
  %480 = vmatmul.mubr.f32.gmra.mrb[0].mxu0 %v413
  %v481 = vpop.f32.mrb[0].mxu0
  %v482 = vadd.f32 0.0, %v481
  %v483 = vpop.f32.mrb[0].mxu0
  %484 = vdwg.mxu0
  %v486 = vrot.slane %v482, 6
  %v487 = vrot.slane %v482, 7
  %v490 = vadd.f32 %v110, %v486
  %v491 = vadd.f32 %v115, %v487
  %v492 = vxor.u32 %v490, 2147483648
  %v493 = vxor.u32 %v491, 2147483648
  %v494 = vmul.f32 %v492, 1.442695
  %v495 = vpow.pop %v494
  %v496 = vmul.f32 %v493, 1.442695
  %v497 = vpow.pop %v496
  %v498 = vadd.f32 %v495, 1.0
  %v499 = vadd.f32 %v497, 1.0
  %v500 = vrcp.pop %v498
  %v501 = vmul.f32 1.0, %v500
  %v502 = vrcp.pop %v499
  %v503 = vmul.f32 1.0, %v502
  %v504 = vtanh.pop %v490
  %v505 = vtanh.pop %v491
  %v508 = vrot.slane %v384, 7
  %v509 = vrot.slane %v385, 7
  %v512 = vmul.f32 %v501, %v508
  %v513 = vmul.f32 %v503, %v509
  %516 = vrot.lane.b32.xlu0 %v504, 64
  %v517 = vpop.permute.xlu0 %516
  %518 = vrot.lane.b32.xlu0 %v505, 64
  %v519 = vpop.permute.xlu0 %518
  %v522 = vmul.f32 %v501, %v517
  %v523 = vmul.f32 %v503, %v519
  %526 = vrot.lane.b32.xlu0 %v522, 32
  %v527 = vpop.permute.xlu0 %526
  %528 = vrot.lane.b32.xlu0 %v523, 32
  %v529 = vpop.permute.xlu0 %528
  %v532 = vadd.f32 %v512, %v527
  %v533 = vadd.f32 %v513, %v529
  %v534 = vtanh.pop %v532
  %v535 = vtanh.pop %v533
  %538 = vrot.lane.b32.xlu0 %v534, 64
  %v539 = vpop.permute.xlu0 %538
  %540 = vrot.lane.b32.xlu0 %v535, 64
  %v541 = vpop.permute.xlu0 %540
  %v544 = vmul.f32 %v501, %v539
  %v545 = vmul.f32 %v503, %v541
  %548 = vrot.lane.b32.xlu0 %v544, 32
  %v549 = vpop.permute.xlu0 %548
  %550 = vrot.lane.b32.xlu0 %v545, 32
  %v551 = vpop.permute.xlu0 %550
  %vm554 = vcmask 256002
  %555 = vst.msk [vmem:[#allocation2] sm:$0x4] %vm554, %v549
  %556 = vst.msk [vmem:[#allocation2 + $0x8] sm:$0x4] %vm554, %v551
  %v557 = vrot.slane %v544, 2
  %v558 = vrot.slane %v545, 1
  %v559 = vsel %vm262, %v558, %v557
  %560 = vrot.lane.b32.xlu0 %v559, 32
  %v561 = vpop.permute.xlu0 %560
  %v562 = vsel %vm122, %v561, 0
  %564 = vmatprep.subr.mxu0 0.0
  %565 = vmatpush1.msra.mxu0 %v118
  %566 = vmatprep.subr.mxu0 0.0
  %567 = vmatpush1.msra.mxu0 %v119
  %568 = vmatprep.subr.mxu0 0.0
  %569 = vmatpush1.msra.mxu0 %v120
  %570 = vmatprep.subr.mxu0 0.0
  %571 = vmatpush1.msra.mxu0 %v121
  %572 = vmatprep.subr.mxu0 0.0
  %573 = vmatpush1.msra.mxu0 0.0
  %574 = vmatprep.subr.mxu0 0.0
  %575 = vmatpush1.msra.mxu0 0.0
  %576 = vmatprep.subr.mxu0 0.0
  %577 = vmatpush1.msra.mxu0 0.0
  %578 = vmatprep.subr.mxu0 0.0
  %579 = vmatpush1.msra.mxu0 0.0
  %580 = vmatprep.subr.mxu0 0.0
  %581 = vmatpush1.msra.mxu0 0.0
  %582 = vmatprep.subr.mxu0 0.0
  %583 = vmatpush1.msra.mxu0 0.0
  %584 = vmatprep.subr.mxu0 0.0
  %585 = vmatpush1.msra.mxu0 0.0
  %586 = vmatprep.subr.mxu0 0.0
  %587 = vmatpush1.msra.mxu0 0.0
  %588 = vmatprep.subr.mxu0 0.0
  %589 = vmatpush1.msra.mxu0 0.0
  %590 = vmatprep.subr.mxu0 0.0
  %591 = vmatpush1.msra.mxu0 0.0
  %592 = vmatprep.subr.mxu0 0.0
  %593 = vmatpush1.msra.mxu0 0.0
  %594 = vmatprep.subr.mxu0 0.0
  %595 = vmatpush1.msra.mxu0 0.0
  %596 = vmatprep.subr.mxu0 0.0
  %597 = vmatpush1.msra.mxu0 0.0
  %598 = vmatprep.subr.mxu0 0.0
  %599 = vmatpush1.msra.mxu0 0.0
  %600 = vmatprep.subr.mxu0 0.0
  %601 = vmatpush1.msra.mxu0 0.0
  %602 = vmatprep.subr.mxu0 0.0
  %603 = vmatpush1.msra.mxu0 0.0
  %604 = vmatprep.subr.mxu0 0.0
  %605 = vmatpush1.msra.mxu0 0.0
  %606 = vmatprep.subr.mxu0 0.0
  %607 = vmatpush1.msra.mxu0 0.0
  %608 = vmatprep.subr.mxu0 0.0
  %609 = vmatpush1.msra.mxu0 0.0
  %610 = vmatprep.subr.mxu0 0.0
  %611 = vmatpush1.msra.mxu0 0.0
  %612 = vmatprep.subr.mxu0 0.0
  %613 = vmatpush1.msra.mxu0 0.0
  %614 = vmatprep.subr.mxu0 0.0
  %615 = vmatpush1.msra.mxu0 0.0
  %616 = vmatprep.subr.mxu0 0.0
  %617 = vmatpush1.msra.mxu0 0.0
  %618 = vmatprep.subr.mxu0 0.0
  %619 = vmatpush1.msra.mxu0 0.0
  %620 = vmatprep.subr.mxu0 0.0
  %621 = vmatpush1.msra.mxu0 0.0
  %622 = vmatprep.subr.mxu0 0.0
  %623 = vmatpush1.msra.mxu0 0.0
  %624 = vmatprep.subr.mxu0 0.0
  %625 = vmatpush1.msra.mxu0 0.0
  %626 = vmatprep.subr.mxu0 0.0
  %627 = vmatpush1.msra.mxu0 0.0
  %628 = vmatprep.mubr.f32.mxu0 0.0
  %629 = vmatmul.mubr.f32.gmra.mrb[0].mxu0 %v562
  %v630 = vpop.f32.mrb[0].mxu0
  %v631 = vadd.f32 0.0, %v630
  %v632 = vpop.f32.mrb[0].mxu0
  %633 = vdwg.mxu0
  %v635 = vrot.slane %v631, 5
  %v636 = vrot.slane %v631, 6
  %v639 = vadd.f32 %v110, %v635
  %v640 = vadd.f32 %v115, %v636
  %v641 = vxor.u32 %v639, 2147483648
  %v642 = vxor.u32 %v640, 2147483648
  %v643 = vmul.f32 %v641, 1.442695
  %v644 = vpow.pop %v643
  %v645 = vmul.f32 %v642, 1.442695
  %v646 = vpow.pop %v645
  %v647 = vadd.f32 %v644, 1.0
  %v648 = vadd.f32 %v646, 1.0
  %v649 = vrcp.pop %v647
  %v650 = vmul.f32 1.0, %v649
  %v651 = vrcp.pop %v648
  %v652 = vmul.f32 1.0, %v651
  %v653 = vtanh.pop %v639
  %v654 = vtanh.pop %v640
  %v657 = vrot.slane %v532, 7
  %v658 = vrot.slane %v533, 7
  %v661 = vmul.f32 %v650, %v657
  %v662 = vmul.f32 %v652, %v658
  %665 = vrot.lane.b32.xlu0 %v653, 64
  %v666 = vpop.permute.xlu0 %665
  %667 = vrot.lane.b32.xlu0 %v654, 64
  %v668 = vpop.permute.xlu0 %667
  %v671 = vmul.f32 %v650, %v666
  %v672 = vmul.f32 %v652, %v668
  %675 = vrot.lane.b32.xlu0 %v671, 32
  %v676 = vpop.permute.xlu0 %675
  %677 = vrot.lane.b32.xlu0 %v672, 32
  %v678 = vpop.permute.xlu0 %677
  %v681 = vadd.f32 %v661, %v676
  %v682 = vadd.f32 %v662, %v678
  %v683 = vtanh.pop %v681
  %v684 = vtanh.pop %v682
  %687 = vrot.lane.b32.xlu0 %v683, 64
  %v688 = vpop.permute.xlu0 %687
  %689 = vrot.lane.b32.xlu0 %v684, 64
  %v690 = vpop.permute.xlu0 %689
  %v693 = vmul.f32 %v650, %v688
  %v694 = vmul.f32 %v652, %v690
  %697 = vrot.lane.b32.xlu0 %v693, 32
  %v698 = vpop.permute.xlu0 %697
  %699 = vrot.lane.b32.xlu0 %v694, 32
  %v700 = vpop.permute.xlu0 %699
  %vm703 = vcmask 257027
  %704 = vst.msk [vmem:[#allocation2] sm:$0x8] %vm703, %v698
  %705 = vst.msk [vmem:[#allocation2 + $0x8] sm:$0x8] %vm703, %v700
  %v706 = vrot.slane %v693, 3
  %v707 = vrot.slane %v694, 2
  %v708 = vsel %vm262, %v707, %v706
  %709 = vrot.lane.b32.xlu0 %v708, 32
  %v710 = vpop.permute.xlu0 %709
  %v711 = vsel %vm122, %v710, 0
  %713 = vmatprep.subr.mxu0 0.0
  %714 = vmatpush1.msra.mxu0 %v118
  %715 = vmatprep.subr.mxu0 0.0
  %716 = vmatpush1.msra.mxu0 %v119
  %717 = vmatprep.subr.mxu0 0.0
  %718 = vmatpush1.msra.mxu0 %v120
  %719 = vmatprep.subr.mxu0 0.0
  %720 = vmatpush1.msra.mxu0 %v121
  %721 = vmatprep.subr.mxu0 0.0
  %722 = vmatpush1.msra.mxu0 0.0
  %723 = vmatprep.subr.mxu0 0.0
  %724 = vmatpush1.msra.mxu0 0.0
  %725 = vmatprep.subr.mxu0 0.0
  %726 = vmatpush1.msra.mxu0 0.0
  %727 = vmatprep.subr.mxu0 0.0
  %728 = vmatpush1.msra.mxu0 0.0
  %729 = vmatprep.subr.mxu0 0.0
  %730 = vmatpush1.msra.mxu0 0.0
  %731 = vmatprep.subr.mxu0 0.0
  %732 = vmatpush1.msra.mxu0 0.0
  %733 = vmatprep.subr.mxu0 0.0
  %734 = vmatpush1.msra.mxu0 0.0
  %735 = vmatprep.subr.mxu0 0.0
  %736 = vmatpush1.msra.mxu0 0.0
  %737 = vmatprep.subr.mxu0 0.0
  %738 = vmatpush1.msra.mxu0 0.0
  %739 = vmatprep.subr.mxu0 0.0
  %740 = vmatpush1.msra.mxu0 0.0
  %741 = vmatprep.subr.mxu0 0.0
  %742 = vmatpush1.msra.mxu0 0.0
  %743 = vmatprep.subr.mxu0 0.0
  %744 = vmatpush1.msra.mxu0 0.0
  %745 = vmatprep.subr.mxu0 0.0
  %746 = vmatpush1.msra.mxu0 0.0
  %747 = vmatprep.subr.mxu0 0.0
  %748 = vmatpush1.msra.mxu0 0.0
  %749 = vmatprep.subr.mxu0 0.0
  %750 = vmatpush1.msra.mxu0 0.0
  %751 = vmatprep.subr.mxu0 0.0
  %752 = vmatpush1.msra.mxu0 0.0
  %753 = vmatprep.subr.mxu0 0.0
  %754 = vmatpush1.msra.mxu0 0.0
  %755 = vmatprep.subr.mxu0 0.0
  %756 = vmatpush1.msra.mxu0 0.0
  %757 = vmatprep.subr.mxu0 0.0
  %758 = vmatpush1.msra.mxu0 0.0
  %759 = vmatprep.subr.mxu0 0.0
  %760 = vmatpush1.msra.mxu0 0.0
  %761 = vmatprep.subr.mxu0 0.0
  %762 = vmatpush1.msra.mxu0 0.0
  %763 = vmatprep.subr.mxu0 0.0
  %764 = vmatpush1.msra.mxu0 0.0
  %765 = vmatprep.subr.mxu0 0.0
  %766 = vmatpush1.msra.mxu0 0.0
  %767 = vmatprep.subr.mxu0 0.0
  %768 = vmatpush1.msra.mxu0 0.0
  %769 = vmatprep.subr.mxu0 0.0
  %770 = vmatpush1.msra.mxu0 0.0
  %771 = vmatprep.subr.mxu0 0.0
  %772 = vmatpush1.msra.mxu0 0.0
  %773 = vmatprep.subr.mxu0 0.0
  %774 = vmatpush1.msra.mxu0 0.0
  %775 = vmatprep.subr.mxu0 0.0
  %776 = vmatpush1.msra.mxu0 0.0
  %777 = vmatprep.mubr.f32.mxu0 0.0
  %778 = vmatmul.mubr.f32.gmra.mrb[0].mxu0 %v711
  %v779 = vpop.f32.mrb[0].mxu0
  %v780 = vadd.f32 0.0, %v779
  %v781 = vpop.f32.mrb[0].mxu0
  %782 = vdwg.mxu0
  %v784 = vrot.slane %v780, 4
  %v785 = vrot.slane %v780, 5
  %v788 = vadd.f32 %v110, %v784
  %v789 = vadd.f32 %v115, %v785
  %v790 = vxor.u32 %v788, 2147483648
  %v791 = vxor.u32 %v789, 2147483648
  %v792 = vmul.f32 %v790, 1.442695
  %v793 = vpow.pop %v792
  %v794 = vmul.f32 %v791, 1.442695
  %v795 = vpow.pop %v794
  %v796 = vadd.f32 %v793, 1.0
  %v797 = vadd.f32 %v795, 1.0
  %v798 = vrcp.pop %v796
  %v799 = vmul.f32 1.0, %v798
  %v800 = vrcp.pop %v797
  %v801 = vmul.f32 1.0, %v800
  %v802 = vtanh.pop %v788
  %v803 = vtanh.pop %v789
  %v806 = vrot.slane %v681, 7
  %v807 = vrot.slane %v682, 7
  %v810 = vmul.f32 %v799, %v806
  %v811 = vmul.f32 %v801, %v807
  %814 = vrot.lane.b32.xlu0 %v802, 64
  %v815 = vpop.permute.xlu0 %814
  %816 = vrot.lane.b32.xlu0 %v803, 64
  %v817 = vpop.permute.xlu0 %816
  %v820 = vmul.f32 %v799, %v815
  %v821 = vmul.f32 %v801, %v817
  %824 = vrot.lane.b32.xlu0 %v820, 32
  %v825 = vpop.permute.xlu0 %824
  %826 = vrot.lane.b32.xlu0 %v821, 32
  %v827 = vpop.permute.xlu0 %826
  %v830 = vadd.f32 %v810, %v825
  %v831 = vadd.f32 %v811, %v827
  %v832 = vtanh.pop %v830
  %v833 = vtanh.pop %v831
  %836 = vrot.lane.b32.xlu0 %v832, 64
  %v837 = vpop.permute.xlu0 %836
  %838 = vrot.lane.b32.xlu0 %v833, 64
  %v839 = vpop.permute.xlu0 %838
  %v842 = vmul.f32 %v799, %v837
  %v843 = vmul.f32 %v801, %v839
  %846 = vrot.lane.b32.xlu0 %v842, 32
  %v847 = vpop.permute.xlu0 %846
  %848 = vrot.lane.b32.xlu0 %v843, 32
  %v849 = vpop.permute.xlu0 %848
  %vm852 = vcmask 258052
  %853 = vst.msk [vmem:[#allocation2] sm:$0x10] %vm852, %v847
  %854 = vst.msk [vmem:[#allocation2 + $0x8] sm:$0x10] %vm852, %v849
  %v855 = vrot.slane %v842, 4
  %v856 = vrot.slane %v843, 3
  %v857 = vsel %vm262, %v856, %v855
  %858 = vrot.lane.b32.xlu0 %v857, 32
  %v859 = vpop.permute.xlu0 %858
  %v860 = vsel %vm122, %v859, 0
  %862 = vmatprep.subr.mxu0 0.0
  %863 = vmatpush1.msra.mxu0 %v118
  %864 = vmatprep.subr.mxu0 0.0
  %865 = vmatpush1.msra.mxu0 %v119
  %866 = vmatprep.subr.mxu0 0.0
  %867 = vmatpush1.msra.mxu0 %v120
  %868 = vmatprep.subr.mxu0 0.0
  %869 = vmatpush1.msra.mxu0 %v121
  %870 = vmatprep.subr.mxu0 0.0
  %871 = vmatpush1.msra.mxu0 0.0
  %872 = vmatprep.subr.mxu0 0.0
  %873 = vmatpush1.msra.mxu0 0.0
  %874 = vmatprep.subr.mxu0 0.0
  %875 = vmatpush1.msra.mxu0 0.0
  %876 = vmatprep.subr.mxu0 0.0
  %877 = vmatpush1.msra.mxu0 0.0
  %878 = vmatprep.subr.mxu0 0.0
  %879 = vmatpush1.msra.mxu0 0.0
  %880 = vmatprep.subr.mxu0 0.0
  %881 = vmatpush1.msra.mxu0 0.0
  %882 = vmatprep.subr.mxu0 0.0
  %883 = vmatpush1.msra.mxu0 0.0
  %884 = vmatprep.subr.mxu0 0.0
  %885 = vmatpush1.msra.mxu0 0.0
  %886 = vmatprep.subr.mxu0 0.0
  %887 = vmatpush1.msra.mxu0 0.0
  %888 = vmatprep.subr.mxu0 0.0
  %889 = vmatpush1.msra.mxu0 0.0
  %890 = vmatprep.subr.mxu0 0.0
  %891 = vmatpush1.msra.mxu0 0.0
  %892 = vmatprep.subr.mxu0 0.0
  %893 = vmatpush1.msra.mxu0 0.0
  %894 = vmatprep.subr.mxu0 0.0
  %895 = vmatpush1.msra.mxu0 0.0
  %896 = vmatprep.subr.mxu0 0.0
  %897 = vmatpush1.msra.mxu0 0.0
  %898 = vmatprep.subr.mxu0 0.0
  %899 = vmatpush1.msra.mxu0 0.0
  %900 = vmatprep.subr.mxu0 0.0
  %901 = vmatpush1.msra.mxu0 0.0
  %902 = vmatprep.subr.mxu0 0.0
  %903 = vmatpush1.msra.mxu0 0.0
  %904 = vmatprep.subr.mxu0 0.0
  %905 = vmatpush1.msra.mxu0 0.0
  %906 = vmatprep.subr.mxu0 0.0
  %907 = vmatpush1.msra.mxu0 0.0
  %908 = vmatprep.subr.mxu0 0.0
  %909 = vmatpush1.msra.mxu0 0.0
  %910 = vmatprep.subr.mxu0 0.0
  %911 = vmatpush1.msra.mxu0 0.0
  %912 = vmatprep.subr.mxu0 0.0
  %913 = vmatpush1.msra.mxu0 0.0
  %914 = vmatprep.subr.mxu0 0.0
  %915 = vmatpush1.msra.mxu0 0.0
  %916 = vmatprep.subr.mxu0 0.0
  %917 = vmatpush1.msra.mxu0 0.0
  %918 = vmatprep.subr.mxu0 0.0
  %919 = vmatpush1.msra.mxu0 0.0
  %920 = vmatprep.subr.mxu0 0.0
  %921 = vmatpush1.msra.mxu0 0.0
  %922 = vmatprep.subr.mxu0 0.0
  %923 = vmatpush1.msra.mxu0 0.0
  %924 = vmatprep.subr.mxu0 0.0
  %925 = vmatpush1.msra.mxu0 0.0
  %926 = vmatprep.mubr.f32.mxu0 0.0
  %927 = vmatmul.mubr.f32.gmra.mrb[0].mxu0 %v860
  %v928 = vpop.f32.mrb[0].mxu0
  %v929 = vadd.f32 0.0, %v928
  %v930 = vpop.f32.mrb[0].mxu0
  %931 = vdwg.mxu0
  %v933 = vrot.slane %v929, 3
  %v934 = vrot.slane %v929, 4
  %v937 = vadd.f32 %v110, %v933
  %v938 = vadd.f32 %v115, %v934
  %v939 = vxor.u32 %v937, 2147483648
  %v940 = vxor.u32 %v938, 2147483648
  %v941 = vmul.f32 %v939, 1.442695
  %v942 = vpow.pop %v941
  %v943 = vmul.f32 %v940, 1.442695
  %v944 = vpow.pop %v943
  %v945 = vadd.f32 %v942, 1.0
  %v946 = vadd.f32 %v944, 1.0
  %v947 = vrcp.pop %v945
  %v948 = vmul.f32 1.0, %v947
  %v949 = vrcp.pop %v946
  %v950 = vmul.f32 1.0, %v949
  %v951 = vtanh.pop %v937
  %v952 = vtanh.pop %v938
  %v955 = vrot.slane %v830, 7
  %v956 = vrot.slane %v831, 7
  %v959 = vmul.f32 %v948, %v955
  %v960 = vmul.f32 %v950, %v956
  %963 = vrot.lane.b32.xlu0 %v951, 64
  %v964 = vpop.permute.xlu0 %963
  %965 = vrot.lane.b32.xlu0 %v952, 64
  %v966 = vpop.permute.xlu0 %965
  %v969 = vmul.f32 %v948, %v964
  %v970 = vmul.f32 %v950, %v966
  %973 = vrot.lane.b32.xlu0 %v969, 32
  %v974 = vpop.permute.xlu0 %973
  %975 = vrot.lane.b32.xlu0 %v970, 32
  %v976 = vpop.permute.xlu0 %975
  %v979 = vadd.f32 %v959, %v974
  %v980 = vadd.f32 %v960, %v976
  %v981 = vtanh.pop %v979
  %v982 = vtanh.pop %v980
  %985 = vrot.lane.b32.xlu0 %v981, 64
  %v986 = vpop.permute.xlu0 %985
  %987 = vrot.lane.b32.xlu0 %v982, 64
  %v988 = vpop.permute.xlu0 %987
  %v991 = vmul.f32 %v948, %v986
  %v992 = vmul.f32 %v950, %v988
  %995 = vrot.lane.b32.xlu0 %v991, 32
  %v996 = vpop.permute.xlu0 %995
  %997 = vrot.lane.b32.xlu0 %v992, 32
  %v998 = vpop.permute.xlu0 %997
  %vm1001 = vcmask 259077
  %1002 = vst.msk [vmem:[#allocation2] sm:$0x20] %vm1001, %v996
  %1003 = vst.msk [vmem:[#allocation2 + $0x8] sm:$0x20] %vm1001, %v998
  %v1004 = vrot.slane %v991, 5
  %v1005 = vrot.slane %v992, 4
  %v1006 = vsel %vm262, %v1005, %v1004
  %1007 = vrot.lane.b32.xlu0 %v1006, 32
  %v1008 = vpop.permute.xlu0 %1007
  %v1009 = vsel %vm122, %v1008, 0
  %1011 = vmatprep.subr.mxu0 0.0
  %1012 = vmatpush1.msra.mxu0 %v118
  %1013 = vmatprep.subr.mxu0 0.0
  %1014 = vmatpush1.msra.mxu0 %v119
  %1015 = vmatprep.subr.mxu0 0.0
  %1016 = vmatpush1.msra.mxu0 %v120
  %1017 = vmatprep.subr.mxu0 0.0
  %1018 = vmatpush1.msra.mxu0 %v121
  %1019 = vmatprep.subr.mxu0 0.0
  %1020 = vmatpush1.msra.mxu0 0.0
  %1021 = vmatprep.subr.mxu0 0.0
  %1022 = vmatpush1.msra.mxu0 0.0
  %1023 = vmatprep.subr.mxu0 0.0
  %1024 = vmatpush1.msra.mxu0 0.0
  %1025 = vmatprep.subr.mxu0 0.0
  %1026 = vmatpush1.msra.mxu0 0.0
  %1027 = vmatprep.subr.mxu0 0.0
  %1028 = vmatpush1.msra.mxu0 0.0
  %1029 = vmatprep.subr.mxu0 0.0
  %1030 = vmatpush1.msra.mxu0 0.0
  %1031 = vmatprep.subr.mxu0 0.0
  %1032 = vmatpush1.msra.mxu0 0.0
  %1033 = vmatprep.subr.mxu0 0.0
  %1034 = vmatpush1.msra.mxu0 0.0
  %1035 = vmatprep.subr.mxu0 0.0
  %1036 = vmatpush1.msra.mxu0 0.0
  %1037 = vmatprep.subr.mxu0 0.0
  %1038 = vmatpush1.msra.mxu0 0.0
  %1039 = vmatprep.subr.mxu0 0.0
  %1040 = vmatpush1.msra.mxu0 0.0
  %1041 = vmatprep.subr.mxu0 0.0
  %1042 = vmatpush1.msra.mxu0 0.0
  %1043 = vmatprep.subr.mxu0 0.0
  %1044 = vmatpush1.msra.mxu0 0.0
  %1045 = vmatprep.subr.mxu0 0.0
  %1046 = vmatpush1.msra.mxu0 0.0
  %1047 = vmatprep.subr.mxu0 0.0
  %1048 = vmatpush1.msra.mxu0 0.0
  %1049 = vmatprep.subr.mxu0 0.0
  %1050 = vmatpush1.msra.mxu0 0.0
  %1051 = vmatprep.subr.mxu0 0.0
  %1052 = vmatpush1.msra.mxu0 0.0
  %1053 = vmatprep.subr.mxu0 0.0
  %1054 = vmatpush1.msra.mxu0 0.0
  %1055 = vmatprep.subr.mxu0 0.0
  %1056 = vmatpush1.msra.mxu0 0.0
  %1057 = vmatprep.subr.mxu0 0.0
  %1058 = vmatpush1.msra.mxu0 0.0
  %1059 = vmatprep.subr.mxu0 0.0
  %1060 = vmatpush1.msra.mxu0 0.0
  %1061 = vmatprep.subr.mxu0 0.0
  %1062 = vmatpush1.msra.mxu0 0.0
  %1063 = vmatprep.subr.mxu0 0.0
  %1064 = vmatpush1.msra.mxu0 0.0
  %1065 = vmatprep.subr.mxu0 0.0
  %1066 = vmatpush1.msra.mxu0 0.0
  %1067 = vmatprep.subr.mxu0 0.0
  %1068 = vmatpush1.msra.mxu0 0.0
  %1069 = vmatprep.subr.mxu0 0.0
  %1070 = vmatpush1.msra.mxu0 0.0
  %1071 = vmatprep.subr.mxu0 0.0
  %1072 = vmatpush1.msra.mxu0 0.0
  %1073 = vmatprep.subr.mxu0 0.0
  %1074 = vmatpush1.msra.mxu0 0.0
  %1075 = vmatprep.mubr.f32.mxu0 0.0
  %1076 = vmatmul.mubr.f32.gmra.mrb[0].mxu0 %v1009
  %v1077 = vpop.f32.mrb[0].mxu0
  %v1078 = vadd.f32 0.0, %v1077
  %v1079 = vpop.f32.mrb[0].mxu0
  %1080 = vdwg.mxu0
  %v1082 = vrot.slane %v1078, 2
  %v1083 = vrot.slane %v1078, 3
  %v1086 = vadd.f32 %v110, %v1082
  %v1087 = vadd.f32 %v115, %v1083
  %v1088 = vxor.u32 %v1086, 2147483648
  %v1089 = vxor.u32 %v1087, 2147483648
  %v1090 = vmul.f32 %v1088, 1.442695
  %v1091 = vpow.pop %v1090
  %v1092 = vmul.f32 %v1089, 1.442695
  %v1093 = vpow.pop %v1092
  %v1094 = vadd.f32 %v1091, 1.0
  %v1095 = vadd.f32 %v1093, 1.0
  %v1096 = vrcp.pop %v1094
  %v1097 = vmul.f32 1.0, %v1096
  %v1098 = vrcp.pop %v1095
  %v1099 = vmul.f32 1.0, %v1098
  %v1100 = vtanh.pop %v1086
  %v1101 = vtanh.pop %v1087
  %v1104 = vrot.slane %v979, 7
  %v1105 = vrot.slane %v980, 7
  %v1108 = vmul.f32 %v1097, %v1104
  %v1109 = vmul.f32 %v1099, %v1105
  %1112 = vrot.lane.b32.xlu0 %v1100, 64
  %v1113 = vpop.permute.xlu0 %1112
  %1114 = vrot.lane.b32.xlu0 %v1101, 64
  %v1115 = vpop.permute.xlu0 %1114
  %v1118 = vmul.f32 %v1097, %v1113
  %v1119 = vmul.f32 %v1099, %v1115
  %1122 = vrot.lane.b32.xlu0 %v1118, 32
  %v1123 = vpop.permute.xlu0 %1122
  %1124 = vrot.lane.b32.xlu0 %v1119, 32
  %v1125 = vpop.permute.xlu0 %1124
  %v1128 = vadd.f32 %v1108, %v1123
  %v1129 = vadd.f32 %v1109, %v1125
  %v1130 = vtanh.pop %v1128
  %v1131 = vtanh.pop %v1129
  %1134 = vrot.lane.b32.xlu0 %v1130, 64
  %v1135 = vpop.permute.xlu0 %1134
  %1136 = vrot.lane.b32.xlu0 %v1131, 64
  %v1137 = vpop.permute.xlu0 %1136
  %v1140 = vmul.f32 %v1097, %v1135
  %v1141 = vmul.f32 %v1099, %v1137
  %1144 = vrot.lane.b32.xlu0 %v1140, 32
  %v1145 = vpop.permute.xlu0 %1144
  %1146 = vrot.lane.b32.xlu0 %v1141, 32
  %v1147 = vpop.permute.xlu0 %1146
  %vm1150 = vcmask 260102
  %1151 = vst.msk [vmem:[#allocation2] sm:$0x40] %vm1150, %v1145
  %1152 = vst.msk [vmem:[#allocation2 + $0x8] sm:$0x40] %vm1150, %v1147
  %v1153 = vrot.slane %v1140, 6
  %v1154 = vrot.slane %v1141, 5
  %v1155 = vsel %vm262, %v1154, %v1153
  %1156 = vrot.lane.b32.xlu0 %v1155, 32
  %v1157 = vpop.permute.xlu0 %1156
  %v1158 = vsel %vm122, %v1157, 0
  %1160 = vmatprep.subr.mxu0 0.0
  %1161 = vmatpush1.msra.mxu0 %v118
  %1162 = vmatprep.subr.mxu0 0.0
  %1163 = vmatpush1.msra.mxu0 %v119
  %1164 = vmatprep.subr.mxu0 0.0
  %1165 = vmatpush1.msra.mxu0 %v120
  %1166 = vmatprep.subr.mxu0 0.0
  %1167 = vmatpush1.msra.mxu0 %v121
  %1168 = vmatprep.subr.mxu0 0.0
  %1169 = vmatpush1.msra.mxu0 0.0
  %1170 = vmatprep.subr.mxu0 0.0
  %1171 = vmatpush1.msra.mxu0 0.0
  %1172 = vmatprep.subr.mxu0 0.0
  %1173 = vmatpush1.msra.mxu0 0.0
  %1174 = vmatprep.subr.mxu0 0.0
  %1175 = vmatpush1.msra.mxu0 0.0
  %1176 = vmatprep.subr.mxu0 0.0
  %1177 = vmatpush1.msra.mxu0 0.0
  %1178 = vmatprep.subr.mxu0 0.0
  %1179 = vmatpush1.msra.mxu0 0.0
  %1180 = vmatprep.subr.mxu0 0.0
  %1181 = vmatpush1.msra.mxu0 0.0
  %1182 = vmatprep.subr.mxu0 0.0
  %1183 = vmatpush1.msra.mxu0 0.0
  %1184 = vmatprep.subr.mxu0 0.0
  %1185 = vmatpush1.msra.mxu0 0.0
  %1186 = vmatprep.subr.mxu0 0.0
  %1187 = vmatpush1.msra.mxu0 0.0
  %1188 = vmatprep.subr.mxu0 0.0
  %1189 = vmatpush1.msra.mxu0 0.0
  %1190 = vmatprep.subr.mxu0 0.0
  %1191 = vmatpush1.msra.mxu0 0.0
  %1192 = vmatprep.subr.mxu0 0.0
  %1193 = vmatpush1.msra.mxu0 0.0
  %1194 = vmatprep.subr.mxu0 0.0
  %1195 = vmatpush1.msra.mxu0 0.0
  %1196 = vmatprep.subr.mxu0 0.0
  %1197 = vmatpush1.msra.mxu0 0.0
  %1198 = vmatprep.subr.mxu0 0.0
  %1199 = vmatpush1.msra.mxu0 0.0
  %1200 = vmatprep.subr.mxu0 0.0
  %1201 = vmatpush1.msra.mxu0 0.0
  %1202 = vmatprep.subr.mxu0 0.0
  %1203 = vmatpush1.msra.mxu0 0.0
  %1204 = vmatprep.subr.mxu0 0.0
  %1205 = vmatpush1.msra.mxu0 0.0
  %1206 = vmatprep.subr.mxu0 0.0
  %1207 = vmatpush1.msra.mxu0 0.0
  %1208 = vmatprep.subr.mxu0 0.0
  %1209 = vmatpush1.msra.mxu0 0.0
  %1210 = vmatprep.subr.mxu0 0.0
  %1211 = vmatpush1.msra.mxu0 0.0
  %1212 = vmatprep.subr.mxu0 0.0
  %1213 = vmatpush1.msra.mxu0 0.0
  %1214 = vmatprep.subr.mxu0 0.0
  %1215 = vmatpush1.msra.mxu0 0.0
  %1216 = vmatprep.subr.mxu0 0.0
  %1217 = vmatpush1.msra.mxu0 0.0
  %1218 = vmatprep.subr.mxu0 0.0
  %1219 = vmatpush1.msra.mxu0 0.0
  %1220 = vmatprep.subr.mxu0 0.0
  %1221 = vmatpush1.msra.mxu0 0.0
  %1222 = vmatprep.subr.mxu0 0.0
  %1223 = vmatpush1.msra.mxu0 0.0
  %1224 = vmatprep.mubr.f32.mxu0 0.0
  %1225 = vmatmul.mubr.f32.gmra.mrb[0].mxu0 %v1158
  %v1226 = vpop.f32.mrb[0].mxu0
  %v1227 = vadd.f32 0.0, %v1226
  %v1228 = vpop.f32.mrb[0].mxu0
  %1229 = vdwg.mxu0
  %v1231 = vrot.slane %v1227, 1
  %v1232 = vrot.slane %v1227, 2
  %v1235 = vadd.f32 %v110, %v1231
  %v1236 = vadd.f32 %v115, %v1232
  %v1237 = vxor.u32 %v1235, 2147483648
  %v1238 = vxor.u32 %v1236, 2147483648
  %v1239 = vmul.f32 %v1237, 1.442695
  %v1240 = vpow.pop %v1239
  %v1241 = vmul.f32 %v1238, 1.442695
  %v1242 = vpow.pop %v1241
  %v1243 = vadd.f32 %v1240, 1.0
  %v1244 = vadd.f32 %v1242, 1.0
  %v1245 = vrcp.pop %v1243
  %v1246 = vmul.f32 1.0, %v1245
  %v1247 = vrcp.pop %v1244
  %v1248 = vmul.f32 1.0, %v1247
  %v1249 = vtanh.pop %v1235
  %v1250 = vtanh.pop %v1236
  %v1253 = vrot.slane %v1128, 7
  %v1254 = vrot.slane %v1129, 7
  %v1257 = vmul.f32 %v1246, %v1253
  %v1258 = vmul.f32 %v1248, %v1254
  %1261 = vrot.lane.b32.xlu0 %v1249, 64
  %v1262 = vpop.permute.xlu0 %1261
  %1263 = vrot.lane.b32.xlu0 %v1250, 64
  %v1264 = vpop.permute.xlu0 %1263
  %v1267 = vmul.f32 %v1246, %v1262
  %v1268 = vmul.f32 %v1248, %v1264
  %1271 = vrot.lane.b32.xlu0 %v1267, 32
  %v1272 = vpop.permute.xlu0 %1271
  %1273 = vrot.lane.b32.xlu0 %v1268, 32
  %v1274 = vpop.permute.xlu0 %1273
  %v1277 = vadd.f32 %v1257, %v1272
  %v1278 = vadd.f32 %v1258, %v1274
  %v1279 = vtanh.pop %v1277
  %v1280 = vtanh.pop %v1278
  %1283 = vrot.lane.b32.xlu0 %v1279, 64
  %v1284 = vpop.permute.xlu0 %1283
  %1285 = vrot.lane.b32.xlu0 %v1280, 64
  %v1286 = vpop.permute.xlu0 %1285
  %v1289 = vmul.f32 %v1246, %v1284
  %v1290 = vmul.f32 %v1248, %v1286
  %1293 = vrot.lane.b32.xlu0 %v1289, 32
  %v1294 = vpop.permute.xlu0 %1293
  %1295 = vrot.lane.b32.xlu0 %v1290, 32
  %v1296 = vpop.permute.xlu0 %1295
  %vm1299 = vcmask 261127
  %1300 = vst.msk [vmem:[#allocation2] sm:$0x80] %vm1299, %v1294
  %1301 = vst.msk [vmem:[#allocation2 + $0x8] sm:$0x80] %vm1299, %v1296
  %v1302 = vld [vmem:[#allocation2] sm:$0xff]
  %v1303 = vld [vmem:[#allocation2 + $0x8] sm:$0xff]
  %v1304 = vld [vmem:[%s4] sm:$0xff]
  %v1305 = vld [vmem:[%s4 + $0x8] sm:$0xff]
  %v1306 = vld [vmem:[%s4 + $0x10] sm:$0xff]
  %v1307 = vld [vmem:[%s4 + $0x18] sm:$0xff]
  %v1308 = vld [vmem:[%s5] sm:$0x1]
  %v1310 = vlaneseq
  %v1311 = vshrl.u32 %v1310, 7
  %v1312 = vsub.s32 0, %v1311
  %v1313 = vrot.slane %v1308, %v1312
  %v1316 = vsel %vm122, %v1302, 0
  %v1319 = vsel %vm122, %v1303, 0
  %1321 = vmatprep.subr.mxu0 0.0
  %1322 = vmatpush1.msra.mxu0 %v1304
  %1323 = vmatprep.subr.mxu0 0.0
  %1324 = vmatpush1.msra.mxu0 %v1305
  %1325 = vmatprep.subr.mxu0 0.0
  %1326 = vmatpush1.msra.mxu0 %v1306
  %1327 = vmatprep.subr.mxu0 0.0
  %1328 = vmatpush1.msra.mxu0 %v1307
  %1329 = vmatprep.subr.mxu0 0.0
  %1330 = vmatpush1.msra.mxu0 0.0
  %1331 = vmatprep.subr.mxu0 0.0
  %1332 = vmatpush1.msra.mxu0 0.0
  %1333 = vmatprep.subr.mxu0 0.0
  %1334 = vmatpush1.msra.mxu0 0.0
  %1335 = vmatprep.subr.mxu0 0.0
  %1336 = vmatpush1.msra.mxu0 0.0
  %1337 = vmatprep.subr.mxu0 0.0
  %1338 = vmatpush1.msra.mxu0 0.0
  %1339 = vmatprep.subr.mxu0 0.0
  %1340 = vmatpush1.msra.mxu0 0.0
  %1341 = vmatprep.subr.mxu0 0.0
  %1342 = vmatpush1.msra.mxu0 0.0
  %1343 = vmatprep.subr.mxu0 0.0
  %1344 = vmatpush1.msra.mxu0 0.0
  %1345 = vmatprep.subr.mxu0 0.0
  %1346 = vmatpush1.msra.mxu0 0.0
  %1347 = vmatprep.subr.mxu0 0.0
  %1348 = vmatpush1.msra.mxu0 0.0
  %1349 = vmatprep.subr.mxu0 0.0
  %1350 = vmatpush1.msra.mxu0 0.0
  %1351 = vmatprep.subr.mxu0 0.0
  %1352 = vmatpush1.msra.mxu0 0.0
  %1353 = vmatprep.subr.mxu0 0.0
  %1354 = vmatpush1.msra.mxu0 0.0
  %1355 = vmatprep.subr.mxu0 0.0
  %1356 = vmatpush1.msra.mxu0 0.0
  %1357 = vmatprep.subr.mxu0 0.0
  %1358 = vmatpush1.msra.mxu0 0.0
  %1359 = vmatprep.subr.mxu0 0.0
  %1360 = vmatpush1.msra.mxu0 0.0
  %1361 = vmatprep.subr.mxu0 0.0
  %1362 = vmatpush1.msra.mxu0 0.0
  %1363 = vmatprep.subr.mxu0 0.0
  %1364 = vmatpush1.msra.mxu0 0.0
  %1365 = vmatprep.subr.mxu0 0.0
  %1366 = vmatpush1.msra.mxu0 0.0
  %1367 = vmatprep.subr.mxu0 0.0
  %1368 = vmatpush1.msra.mxu0 0.0
  %1369 = vmatprep.subr.mxu0 0.0
  %1370 = vmatpush1.msra.mxu0 0.0
  %1371 = vmatprep.subr.mxu0 0.0
  %1372 = vmatpush1.msra.mxu0 0.0
  %1373 = vmatprep.subr.mxu0 0.0
  %1374 = vmatpush1.msra.mxu0 0.0
  %1375 = vmatprep.subr.mxu0 0.0
  %1376 = vmatpush1.msra.mxu0 0.0
  %1377 = vmatprep.subr.mxu0 0.0
  %1378 = vmatpush1.msra.mxu0 0.0
  %1379 = vmatprep.subr.mxu0 0.0
  %1380 = vmatpush1.msra.mxu0 0.0
  %1381 = vmatprep.subr.mxu0 0.0
  %1382 = vmatpush1.msra.mxu0 0.0
  %1383 = vmatprep.subr.mxu0 0.0
  %1384 = vmatpush1.msra.mxu0 0.0
  %1385 = vmatprep.mubr.f32.mxu0 0.0
  %1386 = vmatmul.mubr.f32.gmra.mrb[0].mxu0 %v1316
  %v1387 = vpop.f32.mrb[0].mxu0
  %v1388 = vadd.f32 %v1313, %v1387
  %v1389 = vpop.f32.mrb[0].mxu0
  %1390 = vmatprep.mubr.f32.mxu0 0.0
  %1391 = vmatmul.mubr.f32.gmra.mrb[0].mxu0 %v1319
  %v1392 = vpop.f32.mrb[0].mxu0
  %v1393 = vadd.f32 %v1313, %v1392
  %v1394 = vpop.f32.mrb[0].mxu0
  %1395 = vdwg.mxu0
  %v1396 = vsel %vm122, %v1388, -inf
  %1397 = vmax.xlane.f32.xlu0 %v1396
  %v1398 = vpop.xlane.xlu0 %1397
  %v1399 = vsel %vm122, %v1393, -inf
  %1400 = vmax.xlane.f32.xlu0 %v1399
  %v1401 = vpop.xlane.xlu0 %1400
  %v1402 = vsub.f32 %v1388, %v1398
  %v1403 = vsub.f32 %v1393, %v1401
  %v1404 = vmul.f32 %v1402, 1.442695
  %v1405 = vpow.pop %v1404
  %v1406 = vmul.f32 %v1403, 1.442695
  %v1407 = vpow.pop %v1406
  %v1408 = vsel %vm122, %v1405, 0.0
  %1409 = vadd.xlane.f32.xlu0 %v1408
  %v1410 = vpop.xlane.xlu0 %1409
  %v1411 = vsel %vm122, %v1407, 0.0
  %1412 = vadd.xlane.f32.xlu0 %v1411
  %v1413 = vpop.xlane.xlu0 %1412
  %v1414 = vrcp.pop %v1410
  %v1415 = vmul.f32 %v1405, %v1414
  %v1416 = vrcp.pop %v1413
  %v1417 = vmul.f32 %v1407, %v1416
  %v1418 = vld [vmem:[%s6] sm:$0xff]
  %v1419 = vld [vmem:[%s6 + $0x8] sm:$0xff]
  %v1420 = vld [vmem:[%s6 + $0x10] sm:$0xff]
  %v1421 = vld [vmem:[%s6 + $0x18] sm:$0xff]
  %v1423 = vsel %vm122, %v1415, 0
  %v1426 = vsel %vm122, %v1417, 0
  %1428 = vmatprep.subr.mxu0 0.0
  %1429 = vmatpush1.msra.mxu0 %v1418
  %1430 = vmatprep.subr.mxu0 0.0
  %1431 = vmatpush1.msra.mxu0 %v1419
  %1432 = vmatprep.subr.mxu0 0.0
  %1433 = vmatpush1.msra.mxu0 %v1420
  %1434 = vmatprep.subr.mxu0 0.0
  %1435 = vmatpush1.msra.mxu0 %v1421
  %1436 = vmatprep.subr.mxu0 0.0
  %1437 = vmatpush1.msra.mxu0 0.0
  %1438 = vmatprep.subr.mxu0 0.0
  %1439 = vmatpush1.msra.mxu0 0.0
  %1440 = vmatprep.subr.mxu0 0.0
  %1441 = vmatpush1.msra.mxu0 0.0
  %1442 = vmatprep.subr.mxu0 0.0
  %1443 = vmatpush1.msra.mxu0 0.0
  %1444 = vmatprep.subr.mxu0 0.0
  %1445 = vmatpush1.msra.mxu0 0.0
  %1446 = vmatprep.subr.mxu0 0.0
  %1447 = vmatpush1.msra.mxu0 0.0
  %1448 = vmatprep.subr.mxu0 0.0
  %1449 = vmatpush1.msra.mxu0 0.0
  %1450 = vmatprep.subr.mxu0 0.0
  %1451 = vmatpush1.msra.mxu0 0.0
  %1452 = vmatprep.subr.mxu0 0.0
  %1453 = vmatpush1.msra.mxu0 0.0
  %1454 = vmatprep.subr.mxu0 0.0
  %1455 = vmatpush1.msra.mxu0 0.0
  %1456 = vmatprep.subr.mxu0 0.0
  %1457 = vmatpush1.msra.mxu0 0.0
  %1458 = vmatprep.subr.mxu0 0.0
  %1459 = vmatpush1.msra.mxu0 0.0
  %1460 = vmatprep.subr.mxu0 0.0
  %1461 = vmatpush1.msra.mxu0 0.0
  %1462 = vmatprep.subr.mxu0 0.0
  %1463 = vmatpush1.msra.mxu0 0.0
  %1464 = vmatprep.subr.mxu0 0.0
  %1465 = vmatpush1.msra.mxu0 0.0
  %1466 = vmatprep.subr.mxu0 0.0
  %1467 = vmatpush1.msra.mxu0 0.0
  %1468 = vmatprep.subr.mxu0 0.0
  %1469 = vmatpush1.msra.mxu0 0.0
  %1470 = vmatprep.subr.mxu0 0.0
  %1471 = vmatpush1.msra.mxu0 0.0
  %1472 = vmatprep.subr.mxu0 0.0
  %1473 = vmatpush1.msra.mxu0 0.0
  %1474 = vmatprep.subr.mxu0 0.0
  %1475 = vmatpush1.msra.mxu0 0.0
  %1476 = vmatprep.subr.mxu0 0.0
  %1477 = vmatpush1.msra.mxu0 0.0
  %1478 = vmatprep.subr.mxu0 0.0
  %1479 = vmatpush1.msra.mxu0 0.0
  %1480 = vmatprep.subr.mxu0 0.0
  %1481 = vmatpush1.msra.mxu0 0.0
  %1482 = vmatprep.subr.mxu0 0.0
  %1483 = vmatpush1.msra.mxu0 0.0
  %1484 = vmatprep.subr.mxu0 0.0
  %1485 = vmatpush1.msra.mxu0 0.0
  %1486 = vmatprep.subr.mxu0 0.0
  %1487 = vmatpush1.msra.mxu0 0.0
  %1488 = vmatprep.subr.mxu0 0.0
  %1489 = vmatpush1.msra.mxu0 0.0
  %1490 = vmatprep.subr.mxu0 0.0
  %1491 = vmatpush1.msra.mxu0 0.0
  %1492 = vmatprep.mubr.f32.mxu0 0.0
  %1493 = vmatmul.mubr.f32.gmra.mrb[0].mxu0 %v1423
  %v1494 = vpop.f32.mrb[0].mxu0
  %v1495 = vadd.f32 0.0, %v1494
  %v1496 = vpop.f32.mrb[0].mxu0
  %1497 = vmatprep.mubr.f32.mxu0 0.0
  %1498 = vmatmul.mubr.f32.gmra.mrb[0].mxu0 %v1426
  %v1499 = vpop.f32.mrb[0].mxu0
  %v1500 = vadd.f32 0.0, %v1499
  %v1501 = vpop.f32.mrb[0].mxu0
  %1502 = vdwg.mxu0
  %1503 = vst.msk [vmem:[%s7] sm:$0xff] %vm36, %v1495
  %1504 = vst.msk [vmem:[%s7 + $0x8] sm:$0xff] %vm36, %v1500
  // Predicated region
  $region30: #{gaussian_rnn_forward.1} parent=0 // pred_check
    _
  $region31: #{gaussian_rnn_forward.1} parent=0 // pred_check_branch
    %1506 = sbr.rel (0) target = $region33
  $region32: #{gaussian_rnn_forward.1} parent=0 // pred_region
    _
  $region33: #{gaussian_rnn_forward.1} parent=0 // pred_fallthru
    _
  // Predicated region
  $region34: #{gaussian_rnn_forward.1} parent=0 // pred_check
    _
  $region35: #{gaussian_rnn_forward.1} parent=0 // pred_check_branch
    %1508 = sbr.rel (0) target = $region37
  $region36: #{gaussian_rnn_forward.1} parent=0 // pred_region
    _
  $region37: #{gaussian_rnn_forward.1} parent=0 // pred_fallthru
    _

</llo_original>
